<compile_context>
chip_gen: v5e
topology: v5e:2x2
jax: 0.10.0
libtpu: 0.0.40
codegen_flags: <defaults>
</compile_context>

<pallas_src>
import functools

import jax
import jax.numpy as jnp
from jax.experimental import pallas as pl
from jax.experimental.pallas import tpu as pltpu


def lstm_attention_tpr_kernel(
    xg_ref, h0_ref, c0_ref, ctxF_ref, ctxR_ref,
    wh_ref, win_ref, wout_ref,
    out_ref, hN_ref, cN_ref,
    h_sc, c_sc,
    *, t_chunk, hidden_size,
):
    tc = pl.program_id(1)
    H = hidden_size

    # Initialize the carried state on the first time chunk of each batch block.
    @pl.when(tc == 0)
    def _init():
        h_sc[...] = h0_ref[...].astype(jnp.float32)
        c_sc[...] = c0_ref[...].astype(jnp.float32)

    # Resident operands (constant block index over the time axis): load once.
    ctxF = ctxF_ref[...]            # (Bb, L, H)
    ctxR = ctxR_ref[...]            # (Bb, L, H)
    wh = wh_ref[...]                # (H, 4H), gates fused on lanes
    win = win_ref[...]              # (H, H)
    wout_f = wout_ref[0]            # (H, H)
    wout_r = wout_ref[1]            # (H, H)
    wout_h = wout_ref[2]            # (H, H)
    wdt = wh.dtype
    cdt = ctxF.dtype
    bb = ctxF.shape[0]

    def sigmoid(z):                 # logistic via tanh: EUP slot, no VALU divide
        return 0.5 * (jnp.tanh(0.5 * z) + 1.0)

    h = h_sc[...]                   # (Bb, H) f32 carry (kept in vregs for the chunk)
    c = c_sc[...]                   # (Bb, H) f32 carry

    # Fully-unrolled loop over the time chunk (t_chunk is a static Python int).
    for tt in range(t_chunk):
        # x @ W_x + biases was hoisted to the wrapper -> only one MXU dot here.
        gates = xg_ref[tt].astype(jnp.float32) + jnp.dot(
            h.astype(wdt), wh, preferred_element_type=jnp.float32)   # (Bb, 4H)

        i_g = sigmoid(gates[:, 0 * H:1 * H])
        f_g = sigmoid(gates[:, 1 * H:2 * H])
        g_g = jnp.tanh(gates[:, 2 * H:3 * H])
        o_g = sigmoid(gates[:, 3 * H:4 * H])

        c = f_g * c + i_g * g_g
        hy = o_g * jnp.tanh(c)                                        # (Bb, H) f32

        # ---- TPR attention on hy (all contractions on the MXU) --------------
        hy_w = hy.astype(wdt)
        target = jnp.dot(hy_w, win, preferred_element_type=jnp.float32)  # (Bb, H)
        target3 = target.astype(cdt).reshape(bb, 1, H)                   # (Bb, 1, H)

        logits = jnp.einsum('bqh,blh->bql', target3, ctxF,
                            preferred_element_type=jnp.float32)          # (Bb, 1, L)
        m = jnp.max(logits, axis=-1, keepdims=True)
        e = jnp.exp(logits - m)
        s = jnp.sum(e, axis=-1, keepdims=True)
        # EUP approximate reciprocal + one Newton refinement (full f32 precision).
        r = pl.reciprocal(s, approx=True)
        r = r * (2.0 - s * r)
        attn3 = (e * r).astype(cdt)                                       # (Bb, 1, L)

        wctxF = jnp.einsum('bql,blh->bqh', attn3, ctxF,
                           preferred_element_type=jnp.float32)[:, 0, :]   # (Bb, H)
        # Reference-module quirk preserved: contextR is weighted with attnF.
        wctxR = jnp.einsum('bql,blh->bqh', attn3, ctxR,
                           preferred_element_type=jnp.float32)[:, 0, :]   # (Bb, H)

        # h_tilde = tanh(linear_out([wF, wR, hy])), W_out pre-split in wrapper.
        h = jnp.tanh(
            jnp.dot(wctxF.astype(wdt), wout_f, preferred_element_type=jnp.float32)
            + jnp.dot(wctxR.astype(wdt), wout_r, preferred_element_type=jnp.float32)
            + jnp.dot(hy_w, wout_h, preferred_element_type=jnp.float32))

        out_ref[tt] = h.astype(out_ref.dtype)

    # Carry state to the next time chunk.
    h_sc[...] = h
    c_sc[...] = c

    # Final states: write only once, on the last time chunk.
    @pl.when(tc == pl.num_programs(1) - 1)
    def _final():
        hN_ref[...] = h.astype(hN_ref.dtype)
        cN_ref[...] = c.astype(cN_ref.dtype)


def lstm_attention_tpr(x, hidden, ctxF, ctxR, params, *, batch_first=True,
                       t_chunk=None, block_b=None):
    """Pallas forward of LSTMAttentionTPR.

    x:          (B, T, I) if batch_first else (T, B, I)
    hidden:     (h0, c0), each (B, H)
    ctxF, ctxR: (L, B, H)   (same layout as the PyTorch module; transposed here)
    params:     w_ih (4H, I), b_ih (4H,), w_hh (4H, H), b_hh (4H,),
                w_in (H, H), w_out (H, 3H)     (torch.nn.Linear layouts)
    returns (output, (h_last, c_last)) with output (B, T, H) if batch_first.
    """
    h0, c0 = hidden
    xs = jnp.transpose(x, (1, 0, 2)) if batch_first else x     # (T, B, I)
    T, B, _ = xs.shape
    H = h0.shape[1]
    L = ctxF.shape[0]

    ctxF_b = jnp.transpose(ctxF, (1, 0, 2))    # (B, L, H)
    ctxR_b = jnp.transpose(ctxR, (1, 0, 2))

    w_ih, b_ih = params["w_ih"], params["b_ih"]
    w_hh, b_hh = params["w_hh"], params["b_hh"]
    w_in, w_out = params["w_in"], params["w_out"]

    # One-time layout plumbing (free in the XLA wrapper):
    # fused gate weights, gates concatenated on the last (lane) axis: i,f,g,o.
    wx = w_ih.T                                   # (I, 4H)
    wh = w_hh.T                                   # (H, 4H)
    bias = b_ih + b_hh                            # (4H,)
    # Hoist the input-to-gate matmul out of the recurrence: one big matmul
    # (T*B, I) x (I, 4H) at near-peak MXU utilization, biases folded in.
    xg = jnp.einsum('tbi,ik->tbk', xs, wx,
                    preferred_element_type=jnp.float32) + bias  # (T, B, 4H) f32
    win_t = w_in.T                                                           # (H, H)
    wout_t = jnp.stack([w_out[:, j * H:(j + 1) * H].T for j in range(3)])   # (3, H, H)

    # Time chunking: T_CHUNK recurrence steps per grid iteration.
    if t_chunk is None:
        t_chunk = next(c for c in range(min(T, 8), 0, -1) if T % c == 0)
    assert T % t_chunk == 0
    n_t = T // t_chunk

    # Single batch block at these tiny sizes.
    # TODO(synk): for v7x use block_b = B // 2 (pad B to a multiple of 16) so the
    # "parallel" batch axis shards across both TensorCores, and mark resident
    # weight/context specs Buffered(1) to fit v7x's 64 MiB VMEM at large L/H.
    if block_b is None:
        block_b = B
    assert B % block_b == 0
    n_b = B // block_b
    grid = (n_b, n_t)

    in_specs = [
        pl.BlockSpec((t_chunk, block_b, 4 * H), lambda b, t: (t, b, 0)),  # xg chunk
        pl.BlockSpec((block_b, H), lambda b, t: (b, 0)),                  # h0
        pl.BlockSpec((block_b, H), lambda b, t: (b, 0)),                  # c0
        pl.BlockSpec((block_b, L, H), lambda b, t: (b, 0, 0)),            # ctxF (resident)
        pl.BlockSpec((block_b, L, H), lambda b, t: (b, 0, 0)),            # ctxR (resident)
        pl.BlockSpec((H, 4 * H), lambda b, t: (0, 0)),                    # fused W_h^T
        pl.BlockSpec((H, H), lambda b, t: (0, 0)),                        # W_in^T
        pl.BlockSpec((3, H, H), lambda b, t: (0, 0, 0)),                  # W_out^T split
    ]
    out_specs = (
        pl.BlockSpec((t_chunk, block_b, H), lambda b, t: (t, b, 0)),      # output chunk
        pl.BlockSpec((block_b, H), lambda b, t: (b, 0)),                  # h_last
        pl.BlockSpec((block_b, H), lambda b, t: (b, 0)),                  # c_last
    )
    out_shape = (
        jax.ShapeDtypeStruct((T, B, H), x.dtype),
        jax.ShapeDtypeStruct((B, H), x.dtype),
        jax.ShapeDtypeStruct((B, H), x.dtype),
    )

    kernel = functools.partial(lstm_attention_tpr_kernel,
                               t_chunk=t_chunk, hidden_size=H)

    out, h_last, c_last = pl.pallas_call(
        kernel,
        out_shape=out_shape,
        grid=grid,
        in_specs=in_specs,
        out_specs=out_specs,
        scratch_shapes=[
            pltpu.VMEM((block_b, H), jnp.float32),   # h carry across chunks
            pltpu.VMEM((block_b, H), jnp.float32),   # c carry across chunks
        ],
        compiler_params=pltpu.CompilerParams(
            dimension_semantics=("parallel", "arbitrary"),
            # Only matters when scaling H/L/B (v5e scoped default is 16 MiB);
            # stays below v7x's 64 MiB physical VMEM.
            vmem_limit_bytes=48 * 1024 * 1024,
        ),
    )(xg, h0, c0, ctxF_b, ctxR_b, wh, win_t, wout_t)

    if batch_first:
        out = jnp.transpose(out, (1, 0, 2))
    return out, (h_last, c_last)


def lstm_attention_tpr_reference(x, hidden, ctxF, ctxR, params, *, batch_first=True):
    """Pure-JAX mirror of the PyTorch forward (bug in TPRAttention preserved)."""
    h, c = hidden
    w_ih, b_ih = params["w_ih"], params["b_ih"]
    w_hh, b_hh = params["w_hh"], params["b_hh"]
    w_in, w_out = params["w_in"], params["w_out"]

    xs = jnp.transpose(x, (1, 0, 2)) if batch_first else x     # (T, B, I)
    cF = jnp.transpose(ctxF, (1, 0, 2))                        # (B, L, H)
    cR = jnp.transpose(ctxR, (1, 0, 2))

    outs = []
    for t in range(xs.shape[0]):
        gates = xs[t] @ w_ih.T + b_ih + h @ w_hh.T + b_hh
        i_, f_, g_, o_ = jnp.split(gates, 4, axis=1)
        i_ = jax.nn.sigmoid(i_)
        f_ = jax.nn.sigmoid(f_)
        g_ = jnp.tanh(g_)
        o_ = jax.nn.sigmoid(o_)
        cy = f_ * c + i_ * g_
        hy = o_ * jnp.tanh(cy)

        target = hy @ w_in.T
        attnF = jax.nn.softmax(jnp.einsum("bld,bd->bl", cF, target), axis=-1)
        wF = jnp.einsum("bl,bld->bd", attnF, cF)
        wR = jnp.einsum("bl,bld->bd", attnF, cR)   # original module uses attnF here
        h_tilde = jnp.tanh(jnp.concatenate([wF, wR, hy], axis=1) @ w_out.T)

        h, c = h_tilde, cy
        outs.append(h_tilde)

    out = jnp.stack(outs, axis=0)                  # (T, B, H)
    if batch_first:
        out = jnp.transpose(out, (1, 0, 2))
    return out, (h, c)


if __name__ == "__main__":
    B, T, L = 2, 4, 8       # batch, time steps, sourceL
    I, H = 32, 32           # input_size, hidden_size

    key = jax.random.PRNGKey(0)
    ks = jax.random.split(key, 11)

    x = jax.random.normal(ks[0], (B, T, I), jnp.float32)
    h0 = jax.random.normal(ks[1], (B, H), jnp.float32)
    c0 = jax.random.normal(ks[2], (B, H), jnp.float32)
    ctxF = jax.random.normal(ks[3], (L, B, H), jnp.float32)
    ctxR = jax.random.normal(ks[4], (L, B, H), jnp.float32)

    def uinit(k, shape, fan_in):     # torch.nn.Linear default init
        bound = 1.0 / (fan_in ** 0.5)
        return jax.random.uniform(k, shape, jnp.float32, -bound, bound)

    params = dict(
        w_ih=uinit(ks[5], (4 * H, I), I),
        b_ih=uinit(ks[6], (4 * H,), I),
        w_hh=uinit(ks[7], (4 * H, H), H),
        b_hh=uinit(ks[8], (4 * H,), H),
        w_in=uinit(ks[9], (H, H), H),
        w_out=uinit(ks[10], (H, 3 * H), 3 * H),
    )

    out, (hN, cN) = lstm_attention_tpr(x, (h0, c0), ctxF, ctxR, params)
    out, hN, cN = jax.block_until_ready((out, hN, cN))

    out_r, (hN_r, cN_r) = lstm_attention_tpr_reference(x, (h0, c0), ctxF, ctxR, params)

    assert out.shape == (B, T, H)
    assert jnp.allclose(out, out_r, atol=1e-4, rtol=1e-4), "output mismatch"
    assert jnp.allclose(hN, hN_r, atol=1e-4, rtol=1e-4), "h_last mismatch"
    assert jnp.allclose(cN, cN_r, atol=1e-4, rtol=1e-4), "c_last mismatch"
    print("KERNEL_OK")
</pallas_src>

<mosaic_0001>
module attributes {stable_mosaic.version = 11 : i64} {
  func.func @lstm_attention_tpr_kernel(%arg0: i32, %arg1: i32, %arg2: memref<4x2x128xf32, #tpu.memory_space<vmem>>, %arg3: memref<2x32xf32, #tpu.memory_space<vmem>>, %arg4: memref<2x32xf32, #tpu.memory_space<vmem>>, %arg5: memref<2x8x32xf32, #tpu.memory_space<vmem>>, %arg6: memref<2x8x32xf32, #tpu.memory_space<vmem>>, %arg7: memref<32x128xf32, #tpu.memory_space<vmem>>, %arg8: memref<32x32xf32, #tpu.memory_space<vmem>>, %arg9: memref<3x32x32xf32, #tpu.memory_space<vmem>>, %arg10: memref<4x2x32xf32, #tpu.memory_space<vmem>>, %arg11: memref<2x32xf32, #tpu.memory_space<vmem>>, %arg12: memref<2x32xf32, #tpu.memory_space<vmem>>, %arg13: memref<2x32xf32, #tpu.memory_space<vmem>>, %arg14: memref<2x32xf32, #tpu.memory_space<vmem>>) attributes {dimension_semantics = [#tpu.dimension_semantics<parallel>, #tpu.dimension_semantics<arbitrary>], iteration_bounds = array<i64: 1, 1>, scalar_prefetch = 0 : i64, scratch_operands = 2 : i64, tpu.core_type = #tpu.core_type<tc>, window_params = [{transform_indices = @transform_0, window_bounds = array<i64: 4, 2, 128>}, {transform_indices = @transform_1, window_bounds = array<i64: 2, 32>}, {transform_indices = @transform_2, window_bounds = array<i64: 2, 32>}, {transform_indices = @transform_3, window_bounds = array<i64: 2, 8, 32>}, {transform_indices = @transform_4, window_bounds = array<i64: 2, 8, 32>}, {pipeline_mode = #tpu.pipeline_mode<synchronous>, transform_indices = @transform_5, window_bounds = array<i64: 32, 128>}, {pipeline_mode = #tpu.pipeline_mode<synchronous>, transform_indices = @transform_6, window_bounds = array<i64: 32, 32>}, {pipeline_mode = #tpu.pipeline_mode<synchronous>, transform_indices = @transform_7, window_bounds = array<i64: 3, 32, 32>}, {transform_indices = @transform_8, window_bounds = array<i64: 4, 2, 32>}, {transform_indices = @transform_9, window_bounds = array<i64: 2, 32>}, {transform_indices = @transform_10, window_bounds = array<i64: 2, 32>}]} {
    %c0_i32 = arith.constant 0 : i32
    %0 = arith.cmpi eq, %arg1, %c0_i32 : i32
    %1 = arith.extui %0 : i1 to i32
    %c0_i32_0 = arith.constant 0 : i32
    %2 = arith.cmpi ne, %1, %c0_i32_0 : i32
    scf.if %2 {
      %c0_129 = arith.constant 0 : index
      %c0_130 = arith.constant 0 : index
      %280 = vector.load %arg3[%c0_129, %c0_130] : memref<2x32xf32, #tpu.memory_space<vmem>>, vector<2x32xf32>
      %c0_131 = arith.constant 0 : index
      %c0_132 = arith.constant 0 : index
      %281 = vector.load %arg13[%c0_131, %c0_132] : memref<2x32xf32, #tpu.memory_space<vmem>>, vector<2x32xf32>
      tpu.vector_store %arg13[%c0_131, %c0_132], %280 {strides = array<i32>} : memref<2x32xf32, #tpu.memory_space<vmem>>, vector<2x32xf32>,
      %c0_133 = arith.constant 0 : index
      %c0_134 = arith.constant 0 : index
      %282 = vector.load %arg4[%c0_133, %c0_134] : memref<2x32xf32, #tpu.memory_space<vmem>>, vector<2x32xf32>
      %c0_135 = arith.constant 0 : index
      %c0_136 = arith.constant 0 : index
      %283 = vector.load %arg14[%c0_135, %c0_136] : memref<2x32xf32, #tpu.memory_space<vmem>>, vector<2x32xf32>
      tpu.vector_store %arg14[%c0_135, %c0_136], %282 {strides = array<i32>} : memref<2x32xf32, #tpu.memory_space<vmem>>, vector<2x32xf32>,
    } else {
    }
    %c0 = arith.constant 0 : index
    %c0_1 = arith.constant 0 : index
    %c0_2 = arith.constant 0 : index
    %3 = vector.load %arg5[%c0, %c0_1, %c0_2] : memref<2x8x32xf32, #tpu.memory_space<vmem>>, vector<2x8x32xf32>
    %c0_3 = arith.constant 0 : index
    %c0_4 = arith.constant 0 : index
    %c0_5 = arith.constant 0 : index
    %4 = vector.load %arg6[%c0_3, %c0_4, %c0_5] : memref<2x8x32xf32, #tpu.memory_space<vmem>>, vector<2x8x32xf32>
    %c0_6 = arith.constant 0 : index
    %c0_7 = arith.constant 0 : index
    %5 = vector.load %arg7[%c0_6, %c0_7] : memref<32x128xf32, #tpu.memory_space<vmem>>, vector<32x128xf32>
    %c0_8 = arith.constant 0 : index
    %c0_9 = arith.constant 0 : index
    %6 = vector.load %arg8[%c0_8, %c0_9] : memref<32x32xf32, #tpu.memory_space<vmem>>, vector<32x32xf32>
    %c0_10 = arith.constant 0 : index
    %c0_11 = arith.constant 0 : index
    %c0_12 = arith.constant 0 : index
    %7 = vector.load %arg9[%c0_10, %c0_11, %c0_12] : memref<3x32x32xf32, #tpu.memory_space<vmem>>, vector<1x32x32xf32>
    %8 = vector.shape_cast %7 : vector<1x32x32xf32> to vector<32x32xf32>
    %c1 = arith.constant 1 : index
    %c0_13 = arith.constant 0 : index
    %c0_14 = arith.constant 0 : index
    %9 = vector.load %arg9[%c1, %c0_13, %c0_14] : memref<3x32x32xf32, #tpu.memory_space<vmem>>, vector<1x32x32xf32>
    %10 = vector.shape_cast %9 : vector<1x32x32xf32> to vector<32x32xf32>
    %c2 = arith.constant 2 : index
    %c0_15 = arith.constant 0 : index
    %c0_16 = arith.constant 0 : index
    %11 = vector.load %arg9[%c2, %c0_15, %c0_16] : memref<3x32x32xf32, #tpu.memory_space<vmem>>, vector<1x32x32xf32>
    %12 = vector.shape_cast %11 : vector<1x32x32xf32> to vector<32x32xf32>
    %c0_17 = arith.constant 0 : index
    %c0_18 = arith.constant 0 : index
    %13 = vector.load %arg13[%c0_17, %c0_18] : memref<2x32xf32, #tpu.memory_space<vmem>>, vector<2x32xf32>
    %c0_19 = arith.constant 0 : index
    %c0_20 = arith.constant 0 : index
    %14 = vector.load %arg14[%c0_19, %c0_20] : memref<2x32xf32, #tpu.memory_space<vmem>>, vector<2x32xf32>
    %c0_21 = arith.constant 0 : index
    %c0_22 = arith.constant 0 : index
    %c0_23 = arith.constant 0 : index
    %15 = vector.load %arg2[%c0_21, %c0_22, %c0_23] : memref<4x2x128xf32, #tpu.memory_space<vmem>>, vector<1x2x128xf32>
    %16 = vector.shape_cast %15 : vector<1x2x128xf32> to vector<2x128xf32>
    %cst = arith.constant dense<0.000000e+00> : vector<2x128xf32>
    %17 = tpu.matmul %13, %5, %cst {dimension_numbers = #tpu.dot_dimension_numbers<[1], [0], [0], [1], [0, 0, 1, 1], [], []>} : vector<2x32xf32>, vector<32x128xf32>, vector<2x128xf32> -> vector<2x128xf32>
    %18 = arith.addf %16, %17 : vector<2x128xf32>
    %19 = vector.extract_strided_slice %18 {offsets = [0, 0], sizes = [2, 32], strides = [1, 1]} : vector<2x128xf32> to vector<2x32xf32>
    %cst_24 = arith.constant 5.000000e-01 : f32
    %20 = vector.broadcast %cst_24 : f32 to vector<2x32xf32>
    %21 = arith.mulf %20, %19 : vector<2x32xf32>
    %22 = math.tanh %21 : vector<2x32xf32>
    %cst_25 = arith.constant 1.000000e+00 : f32
    %23 = vector.broadcast %cst_25 : f32 to vector<2x32xf32>
    %24 = arith.addf %22, %23 : vector<2x32xf32>
    %cst_26 = arith.constant 5.000000e-01 : f32
    %25 = vector.broadcast %cst_26 : f32 to vector<2x32xf32>
    %26 = arith.mulf %25, %24 : vector<2x32xf32>
    %27 = vector.extract_strided_slice %18 {offsets = [0, 32], sizes = [2, 32], strides = [1, 1]} : vector<2x128xf32> to vector<2x32xf32>
    %cst_27 = arith.constant 5.000000e-01 : f32
    %28 = vector.broadcast %cst_27 : f32 to vector<2x32xf32>
    %29 = arith.mulf %28, %27 : vector<2x32xf32>
    %30 = math.tanh %29 : vector<2x32xf32>
    %cst_28 = arith.constant 1.000000e+00 : f32
    %31 = vector.broadcast %cst_28 : f32 to vector<2x32xf32>
    %32 = arith.addf %30, %31 : vector<2x32xf32>
    %cst_29 = arith.constant 5.000000e-01 : f32
    %33 = vector.broadcast %cst_29 : f32 to vector<2x32xf32>
    %34 = arith.mulf %33, %32 : vector<2x32xf32>
    %35 = vector.extract_strided_slice %18 {offsets = [0, 64], sizes = [2, 32], strides = [1, 1]} : vector<2x128xf32> to vector<2x32xf32>
    %36 = math.tanh %35 : vector<2x32xf32>
    %37 = vector.extract_strided_slice %18 {offsets = [0, 96], sizes = [2, 32], strides = [1, 1]} : vector<2x128xf32> to vector<2x32xf32>
    %cst_30 = arith.constant 5.000000e-01 : f32
    %38 = vector.broadcast %cst_30 : f32 to vector<2x32xf32>
    %39 = arith.mulf %38, %37 : vector<2x32xf32>
    %40 = math.tanh %39 : vector<2x32xf32>
    %cst_31 = arith.constant 1.000000e+00 : f32
    %41 = vector.broadcast %cst_31 : f32 to vector<2x32xf32>
    %42 = arith.addf %40, %41 : vector<2x32xf32>
    %cst_32 = arith.constant 5.000000e-01 : f32
    %43 = vector.broadcast %cst_32 : f32 to vector<2x32xf32>
    %44 = arith.mulf %43, %42 : vector<2x32xf32>
    %45 = arith.mulf %34, %14 : vector<2x32xf32>
    %46 = arith.mulf %26, %36 : vector<2x32xf32>
    %47 = arith.addf %45, %46 : vector<2x32xf32>
    %48 = math.tanh %47 : vector<2x32xf32>
    %49 = arith.mulf %44, %48 : vector<2x32xf32>
    %cst_33 = arith.constant dense<0.000000e+00> : vector<2x32xf32>
    %50 = tpu.matmul %49, %6, %cst_33 {dimension_numbers = #tpu.dot_dimension_numbers<[1], [0], [0], [1], [0, 0, 1, 1], [], []>} : vector<2x32xf32>, vector<32x32xf32>, vector<2x32xf32> -> vector<2x32xf32>
    %51 = vector.shape_cast %50 : vector<2x32xf32> to vector<2x1x32xf32>
    "tpu.trace_start"() <{level = 10 : i32, message = "bqh,blh->bql"}> : () -> ()
    %cst_34 = arith.constant dense<0.000000e+00> : vector<2x1x8xf32>
    %52 = tpu.matmul %51, %3, %cst_34 {dimension_numbers = #tpu.dot_dimension_numbers<[2], [2], [1], [1], [0, 0, 0, 1, 1, 1], [0], [0]>} : vector<2x1x32xf32>, vector<2x8x32xf32>, vector<2x1x8xf32> -> vector<2x1x8xf32>
    "tpu.trace_stop"() : () -> ()
    %cst_35 = arith.constant dense<0xFF800000> : vector<2x1xf32>
    %53 = vector.multi_reduction <maximumf>, %52, %cst_35 [2] : vector<2x1x8xf32> to vector<2x1xf32>
    %54 = vector.shape_cast %53 : vector<2x1xf32> to vector<2x1x1xf32>
    %55 = vector.broadcast %54 : vector<2x1x1xf32> to vector<2x1x8xf32>
    %56 = arith.subf %52, %55 : vector<2x1x8xf32>
    %57 = math.exp %56 : vector<2x1x8xf32>
    %cst_36 = arith.constant dense<0.000000e+00> : vector<2x1xf32>
    %58 = vector.multi_reduction <add>, %57, %cst_36 [2] : vector<2x1x8xf32> to vector<2x1xf32>
    %59 = vector.shape_cast %58 : vector<2x1xf32> to vector<2x1x1xf32>
    %60 = tpu.reciprocal %59 {approx = true} : vector<2x1x1xf32> -> vector<2x1x1xf32>
    %61 = arith.mulf %59, %60 : vector<2x1x1xf32>
    %cst_37 = arith.constant 2.000000e+00 : f32
    %62 = vector.broadcast %cst_37 : f32 to vector<2x1x1xf32>
    %63 = arith.subf %62, %61 : vector<2x1x1xf32>
    %64 = arith.mulf %60, %63 : vector<2x1x1xf32>
    %65 = vector.broadcast %64 : vector<2x1x1xf32> to vector<2x1x8xf32>
    %66 = arith.mulf %57, %65 : vector<2x1x8xf32>
    "tpu.trace_start"() <{level = 10 : i32, message = "bql,blh->bqh"}> : () -> ()
    %cst_38 = arith.constant dense<0.000000e+00> : vector<2x1x32xf32>
    %67 = tpu.matmul %66, %3, %cst_38 {dimension_numbers = #tpu.dot_dimension_numbers<[2], [1], [1], [2], [0, 0, 0, 1, 1, 2], [0], [0]>} : vector<2x1x8xf32>, vector<2x8x32xf32>, vector<2x1x32xf32> -> vector<2x1x32xf32>
    "tpu.trace_stop"() : () -> ()
    %68 = vector.shape_cast %67 : vector<2x1x32xf32> to vector<2x32xf32>
    "tpu.trace_start"() <{level = 10 : i32, message = "bql,blh->bqh"}> : () -> ()
    %cst_39 = arith.constant dense<0.000000e+00> : vector<2x1x32xf32>
    %69 = tpu.matmul %66, %4, %cst_39 {dimension_numbers = #tpu.dot_dimension_numbers<[2], [1], [1], [2], [0, 0, 0, 1, 1, 2], [0], [0]>} : vector<2x1x8xf32>, vector<2x8x32xf32>, vector<2x1x32xf32> -> vector<2x1x32xf32>
    "tpu.trace_stop"() : () -> ()
    %70 = vector.shape_cast %69 : vector<2x1x32xf32> to vector<2x32xf32>
    %cst_40 = arith.constant dense<0.000000e+00> : vector<2x32xf32>
    %71 = tpu.matmul %68, %8, %cst_40 {dimension_numbers = #tpu.dot_dimension_numbers<[1], [0], [0], [1], [0, 0, 1, 1], [], []>} : vector<2x32xf32>, vector<32x32xf32>, vector<2x32xf32> -> vector<2x32xf32>
    %cst_41 = arith.constant dense<0.000000e+00> : vector<2x32xf32>
    %72 = tpu.matmul %70, %10, %cst_41 {dimension_numbers = #tpu.dot_dimension_numbers<[1], [0], [0], [1], [0, 0, 1, 1], [], []>} : vector<2x32xf32>, vector<32x32xf32>, vector<2x32xf32> -> vector<2x32xf32>
    %73 = arith.addf %71, %72 : vector<2x32xf32>
    %cst_42 = arith.constant dense<0.000000e+00> : vector<2x32xf32>
    %74 = tpu.matmul %49, %12, %cst_42 {dimension_numbers = #tpu.dot_dimension_numbers<[1], [0], [0], [1], [0, 0, 1, 1], [], []>} : vector<2x32xf32>, vector<32x32xf32>, vector<2x32xf32> -> vector<2x32xf32>
    %75 = arith.addf %73, %74 : vector<2x32xf32>
    %76 = math.tanh %75 : vector<2x32xf32>
    %c0_43 = arith.constant 0 : index
    %c0_44 = arith.constant 0 : index
    %c0_45 = arith.constant 0 : index
    %77 = vector.load %arg10[%c0_43, %c0_44, %c0_45] : memref<4x2x32xf32, #tpu.memory_space<vmem>>, vector<1x2x32xf32>
    %78 = vector.shape_cast %77 : vector<1x2x32xf32> to vector<2x32xf32>
    %79 = vector.shape_cast %76 : vector<2x32xf32> to vector<1x2x32xf32>
    tpu.vector_store %arg10[%c0_43, %c0_44, %c0_45], %79 {strides = array<i32>} : memref<4x2x32xf32, #tpu.memory_space<vmem>>, vector<1x2x32xf32>,
    %c1_46 = arith.constant 1 : index
    %c0_47 = arith.constant 0 : index
    %c0_48 = arith.constant 0 : index
    %80 = vector.load %arg2[%c1_46, %c0_47, %c0_48] : memref<4x2x128xf32, #tpu.memory_space<vmem>>, vector<1x2x128xf32>
    %81 = vector.shape_cast %80 : vector<1x2x128xf32> to vector<2x128xf32>
    %cst_49 = arith.constant dense<0.000000e+00> : vector<2x128xf32>
    %82 = tpu.matmul %76, %5, %cst_49 {dimension_numbers = #tpu.dot_dimension_numbers<[1], [0], [0], [1], [0, 0, 1, 1], [], []>} : vector<2x32xf32>, vector<32x128xf32>, vector<2x128xf32> -> vector<2x128xf32>
    %83 = arith.addf %81, %82 : vector<2x128xf32>
    %84 = vector.extract_strided_slice %83 {offsets = [0, 0], sizes = [2, 32], strides = [1, 1]} : vector<2x128xf32> to vector<2x32xf32>
    %cst_50 = arith.constant 5.000000e-01 : f32
    %85 = vector.broadcast %cst_50 : f32 to vector<2x32xf32>
    %86 = arith.mulf %85, %84 : vector<2x32xf32>
    %87 = math.tanh %86 : vector<2x32xf32>
    %cst_51 = arith.constant 1.000000e+00 : f32
    %88 = vector.broadcast %cst_51 : f32 to vector<2x32xf32>
    %89 = arith.addf %87, %88 : vector<2x32xf32>
    %cst_52 = arith.constant 5.000000e-01 : f32
    %90 = vector.broadcast %cst_52 : f32 to vector<2x32xf32>
    %91 = arith.mulf %90, %89 : vector<2x32xf32>
    %92 = vector.extract_strided_slice %83 {offsets = [0, 32], sizes = [2, 32], strides = [1, 1]} : vector<2x128xf32> to vector<2x32xf32>
    %cst_53 = arith.constant 5.000000e-01 : f32
    %93 = vector.broadcast %cst_53 : f32 to vector<2x32xf32>
    %94 = arith.mulf %93, %92 : vector<2x32xf32>
    %95 = math.tanh %94 : vector<2x32xf32>
    %cst_54 = arith.constant 1.000000e+00 : f32
    %96 = vector.broadcast %cst_54 : f32 to vector<2x32xf32>
    %97 = arith.addf %95, %96 : vector<2x32xf32>
    %cst_55 = arith.constant 5.000000e-01 : f32
    %98 = vector.broadcast %cst_55 : f32 to vector<2x32xf32>
    %99 = arith.mulf %98, %97 : vector<2x32xf32>
    %100 = vector.extract_strided_slice %83 {offsets = [0, 64], sizes = [2, 32], strides = [1, 1]} : vector<2x128xf32> to vector<2x32xf32>
    %101 = math.tanh %100 : vector<2x32xf32>
    %102 = vector.extract_strided_slice %83 {offsets = [0, 96], sizes = [2, 32], strides = [1, 1]} : vector<2x128xf32> to vector<2x32xf32>
    %cst_56 = arith.constant 5.000000e-01 : f32
    %103 = vector.broadcast %cst_56 : f32 to vector<2x32xf32>
    %104 = arith.mulf %103, %102 : vector<2x32xf32>
    %105 = math.tanh %104 : vector<2x32xf32>
    %cst_57 = arith.constant 1.000000e+00 : f32
    %106 = vector.broadcast %cst_57 : f32 to vector<2x32xf32>
    %107 = arith.addf %105, %106 : vector<2x32xf32>
    %cst_58 = arith.constant 5.000000e-01 : f32
    %108 = vector.broadcast %cst_58 : f32 to vector<2x32xf32>
    %109 = arith.mulf %108, %107 : vector<2x32xf32>
    %110 = arith.mulf %99, %47 : vector<2x32xf32>
    %111 = arith.mulf %91, %101 : vector<2x32xf32>
    %112 = arith.addf %110, %111 : vector<2x32xf32>
    %113 = math.tanh %112 : vector<2x32xf32>
    %114 = arith.mulf %109, %113 : vector<2x32xf32>
    %cst_59 = arith.constant dense<0.000000e+00> : vector<2x32xf32>
    %115 = tpu.matmul %114, %6, %cst_59 {dimension_numbers = #tpu.dot_dimension_numbers<[1], [0], [0], [1], [0, 0, 1, 1], [], []>} : vector<2x32xf32>, vector<32x32xf32>, vector<2x32xf32> -> vector<2x32xf32>
    %116 = vector.shape_cast %115 : vector<2x32xf32> to vector<2x1x32xf32>
    "tpu.trace_start"() <{level = 10 : i32, message = "bqh,blh->bql"}> : () -> ()
    %cst_60 = arith.constant dense<0.000000e+00> : vector<2x1x8xf32>
    %117 = tpu.matmul %116, %3, %cst_60 {dimension_numbers = #tpu.dot_dimension_numbers<[2], [2], [1], [1], [0, 0, 0, 1, 1, 1], [0], [0]>} : vector<2x1x32xf32>, vector<2x8x32xf32>, vector<2x1x8xf32> -> vector<2x1x8xf32>
    "tpu.trace_stop"() : () -> ()
    %cst_61 = arith.constant dense<0xFF800000> : vector<2x1xf32>
    %118 = vector.multi_reduction <maximumf>, %117, %cst_61 [2] : vector<2x1x8xf32> to vector<2x1xf32>
    %119 = vector.shape_cast %118 : vector<2x1xf32> to vector<2x1x1xf32>
    %120 = vector.broadcast %119 : vector<2x1x1xf32> to vector<2x1x8xf32>
    %121 = arith.subf %117, %120 : vector<2x1x8xf32>
    %122 = math.exp %121 : vector<2x1x8xf32>
    %cst_62 = arith.constant dense<0.000000e+00> : vector<2x1xf32>
    %123 = vector.multi_reduction <add>, %122, %cst_62 [2] : vector<2x1x8xf32> to vector<2x1xf32>
    %124 = vector.shape_cast %123 : vector<2x1xf32> to vector<2x1x1xf32>
    %125 = tpu.reciprocal %124 {approx = true} : vector<2x1x1xf32> -> vector<2x1x1xf32>
    %126 = arith.mulf %124, %125 : vector<2x1x1xf32>
    %cst_63 = arith.constant 2.000000e+00 : f32
    %127 = vector.broadcast %cst_63 : f32 to vector<2x1x1xf32>
    %128 = arith.subf %127, %126 : vector<2x1x1xf32>
    %129 = arith.mulf %125, %128 : vector<2x1x1xf32>
    %130 = vector.broadcast %129 : vector<2x1x1xf32> to vector<2x1x8xf32>
    %131 = arith.mulf %122, %130 : vector<2x1x8xf32>
    "tpu.trace_start"() <{level = 10 : i32, message = "bql,blh->bqh"}> : () -> ()
    %cst_64 = arith.constant dense<0.000000e+00> : vector<2x1x32xf32>
    %132 = tpu.matmul %131, %3, %cst_64 {dimension_numbers = #tpu.dot_dimension_numbers<[2], [1], [1], [2], [0, 0, 0, 1, 1, 2], [0], [0]>} : vector<2x1x8xf32>, vector<2x8x32xf32>, vector<2x1x32xf32> -> vector<2x1x32xf32>
    "tpu.trace_stop"() : () -> ()
    %133 = vector.shape_cast %132 : vector<2x1x32xf32> to vector<2x32xf32>
    "tpu.trace_start"() <{level = 10 : i32, message = "bql,blh->bqh"}> : () -> ()
    %cst_65 = arith.constant dense<0.000000e+00> : vector<2x1x32xf32>
    %134 = tpu.matmul %131, %4, %cst_65 {dimension_numbers = #tpu.dot_dimension_numbers<[2], [1], [1], [2], [0, 0, 0, 1, 1, 2], [0], [0]>} : vector<2x1x8xf32>, vector<2x8x32xf32>, vector<2x1x32xf32> -> vector<2x1x32xf32>
    "tpu.trace_stop"() : () -> ()
    %135 = vector.shape_cast %134 : vector<2x1x32xf32> to vector<2x32xf32>
    %cst_66 = arith.constant dense<0.000000e+00> : vector<2x32xf32>
    %136 = tpu.matmul %133, %8, %cst_66 {dimension_numbers = #tpu.dot_dimension_numbers<[1], [0], [0], [1], [0, 0, 1, 1], [], []>} : vector<2x32xf32>, vector<32x32xf32>, vector<2x32xf32> -> vector<2x32xf32>
    %cst_67 = arith.constant dense<0.000000e+00> : vector<2x32xf32>
    %137 = tpu.matmul %135, %10, %cst_67 {dimension_numbers = #tpu.dot_dimension_numbers<[1], [0], [0], [1], [0, 0, 1, 1], [], []>} : vector<2x32xf32>, vector<32x32xf32>, vector<2x32xf32> -> vector<2x32xf32>
    %138 = arith.addf %136, %137 : vector<2x32xf32>
    %cst_68 = arith.constant dense<0.000000e+00> : vector<2x32xf32>
    %139 = tpu.matmul %114, %12, %cst_68 {dimension_numbers = #tpu.dot_dimension_numbers<[1], [0], [0], [1], [0, 0, 1, 1], [], []>} : vector<2x32xf32>, vector<32x32xf32>, vector<2x32xf32> -> vector<2x32xf32>
    %140 = arith.addf %138, %139 : vector<2x32xf32>
    %141 = math.tanh %140 : vector<2x32xf32>
    %c1_69 = arith.constant 1 : index
    %c0_70 = arith.constant 0 : index
    %c0_71 = arith.constant 0 : index
    %142 = vector.load %arg10[%c1_69, %c0_70, %c0_71] : memref<4x2x32xf32, #tpu.memory_space<vmem>>, vector<1x2x32xf32>
    %143 = vector.shape_cast %142 : vector<1x2x32xf32> to vector<2x32xf32>
    %144 = vector.shape_cast %141 : vector<2x32xf32> to vector<1x2x32xf32>
    tpu.vector_store %arg10[%c1_69, %c0_70, %c0_71], %144 {strides = array<i32>} : memref<4x2x32xf32, #tpu.memory_space<vmem>>, vector<1x2x32xf32>,
    %c2_72 = arith.constant 2 : index
    %c0_73 = arith.constant 0 : index
    %c0_74 = arith.constant 0 : index
    %145 = vector.load %arg2[%c2_72, %c0_73, %c0_74] : memref<4x2x128xf32, #tpu.memory_space<vmem>>, vector<1x2x128xf32>
    %146 = vector.shape_cast %145 : vector<1x2x128xf32> to vector<2x128xf32>
    %cst_75 = arith.constant dense<0.000000e+00> : vector<2x128xf32>
    %147 = tpu.matmul %141, %5, %cst_75 {dimension_numbers = #tpu.dot_dimension_numbers<[1], [0], [0], [1], [0, 0, 1, 1], [], []>} : vector<2x32xf32>, vector<32x128xf32>, vector<2x128xf32> -> vector<2x128xf32>
    %148 = arith.addf %146, %147 : vector<2x128xf32>
    %149 = vector.extract_strided_slice %148 {offsets = [0, 0], sizes = [2, 32], strides = [1, 1]} : vector<2x128xf32> to vector<2x32xf32>
    %cst_76 = arith.constant 5.000000e-01 : f32
    %150 = vector.broadcast %cst_76 : f32 to vector<2x32xf32>
    %151 = arith.mulf %150, %149 : vector<2x32xf32>
    %152 = math.tanh %151 : vector<2x32xf32>
    %cst_77 = arith.constant 1.000000e+00 : f32
    %153 = vector.broadcast %cst_77 : f32 to vector<2x32xf32>
    %154 = arith.addf %152, %153 : vector<2x32xf32>
    %cst_78 = arith.constant 5.000000e-01 : f32
    %155 = vector.broadcast %cst_78 : f32 to vector<2x32xf32>
    %156 = arith.mulf %155, %154 : vector<2x32xf32>
    %157 = vector.extract_strided_slice %148 {offsets = [0, 32], sizes = [2, 32], strides = [1, 1]} : vector<2x128xf32> to vector<2x32xf32>
    %cst_79 = arith.constant 5.000000e-01 : f32
    %158 = vector.broadcast %cst_79 : f32 to vector<2x32xf32>
    %159 = arith.mulf %158, %157 : vector<2x32xf32>
    %160 = math.tanh %159 : vector<2x32xf32>
    %cst_80 = arith.constant 1.000000e+00 : f32
    %161 = vector.broadcast %cst_80 : f32 to vector<2x32xf32>
    %162 = arith.addf %160, %161 : vector<2x32xf32>
    %cst_81 = arith.constant 5.000000e-01 : f32
    %163 = vector.broadcast %cst_81 : f32 to vector<2x32xf32>
    %164 = arith.mulf %163, %162 : vector<2x32xf32>
    %165 = vector.extract_strided_slice %148 {offsets = [0, 64], sizes = [2, 32], strides = [1, 1]} : vector<2x128xf32> to vector<2x32xf32>
    %166 = math.tanh %165 : vector<2x32xf32>
    %167 = vector.extract_strided_slice %148 {offsets = [0, 96], sizes = [2, 32], strides = [1, 1]} : vector<2x128xf32> to vector<2x32xf32>
    %cst_82 = arith.constant 5.000000e-01 : f32
    %168 = vector.broadcast %cst_82 : f32 to vector<2x32xf32>
    %169 = arith.mulf %168, %167 : vector<2x32xf32>
    %170 = math.tanh %169 : vector<2x32xf32>
    %cst_83 = arith.constant 1.000000e+00 : f32
    %171 = vector.broadcast %cst_83 : f32 to vector<2x32xf32>
    %172 = arith.addf %170, %171 : vector<2x32xf32>
    %cst_84 = arith.constant 5.000000e-01 : f32
    %173 = vector.broadcast %cst_84 : f32 to vector<2x32xf32>
    %174 = arith.mulf %173, %172 : vector<2x32xf32>
    %175 = arith.mulf %164, %112 : vector<2x32xf32>
    %176 = arith.mulf %156, %166 : vector<2x32xf32>
    %177 = arith.addf %175, %176 : vector<2x32xf32>
    %178 = math.tanh %177 : vector<2x32xf32>
    %179 = arith.mulf %174, %178 : vector<2x32xf32>
    %cst_85 = arith.constant dense<0.000000e+00> : vector<2x32xf32>
    %180 = tpu.matmul %179, %6, %cst_85 {dimension_numbers = #tpu.dot_dimension_numbers<[1], [0], [0], [1], [0, 0, 1, 1], [], []>} : vector<2x32xf32>, vector<32x32xf32>, vector<2x32xf32> -> vector<2x32xf32>
    %181 = vector.shape_cast %180 : vector<2x32xf32> to vector<2x1x32xf32>
    "tpu.trace_start"() <{level = 10 : i32, message = "bqh,blh->bql"}> : () -> ()
    %cst_86 = arith.constant dense<0.000000e+00> : vector<2x1x8xf32>
    %182 = tpu.matmul %181, %3, %cst_86 {dimension_numbers = #tpu.dot_dimension_numbers<[2], [2], [1], [1], [0, 0, 0, 1, 1, 1], [0], [0]>} : vector<2x1x32xf32>, vector<2x8x32xf32>, vector<2x1x8xf32> -> vector<2x1x8xf32>
    "tpu.trace_stop"() : () -> ()
    %cst_87 = arith.constant dense<0xFF800000> : vector<2x1xf32>
    %183 = vector.multi_reduction <maximumf>, %182, %cst_87 [2] : vector<2x1x8xf32> to vector<2x1xf32>
    %184 = vector.shape_cast %183 : vector<2x1xf32> to vector<2x1x1xf32>
    %185 = vector.broadcast %184 : vector<2x1x1xf32> to vector<2x1x8xf32>
    %186 = arith.subf %182, %185 : vector<2x1x8xf32>
    %187 = math.exp %186 : vector<2x1x8xf32>
    %cst_88 = arith.constant dense<0.000000e+00> : vector<2x1xf32>
    %188 = vector.multi_reduction <add>, %187, %cst_88 [2] : vector<2x1x8xf32> to vector<2x1xf32>
    %189 = vector.shape_cast %188 : vector<2x1xf32> to vector<2x1x1xf32>
    %190 = tpu.reciprocal %189 {approx = true} : vector<2x1x1xf32> -> vector<2x1x1xf32>
    %191 = arith.mulf %189, %190 : vector<2x1x1xf32>
    %cst_89 = arith.constant 2.000000e+00 : f32
    %192 = vector.broadcast %cst_89 : f32 to vector<2x1x1xf32>
    %193 = arith.subf %192, %191 : vector<2x1x1xf32>
    %194 = arith.mulf %190, %193 : vector<2x1x1xf32>
    %195 = vector.broadcast %194 : vector<2x1x1xf32> to vector<2x1x8xf32>
    %196 = arith.mulf %187, %195 : vector<2x1x8xf32>
    "tpu.trace_start"() <{level = 10 : i32, message = "bql,blh->bqh"}> : () -> ()
    %cst_90 = arith.constant dense<0.000000e+00> : vector<2x1x32xf32>
    %197 = tpu.matmul %196, %3, %cst_90 {dimension_numbers = #tpu.dot_dimension_numbers<[2], [1], [1], [2], [0, 0, 0, 1, 1, 2], [0], [0]>} : vector<2x1x8xf32>, vector<2x8x32xf32>, vector<2x1x32xf32> -> vector<2x1x32xf32>
    "tpu.trace_stop"() : () -> ()
    %198 = vector.shape_cast %197 : vector<2x1x32xf32> to vector<2x32xf32>
    "tpu.trace_start"() <{level = 10 : i32, message = "bql,blh->bqh"}> : () -> ()
    %cst_91 = arith.constant dense<0.000000e+00> : vector<2x1x32xf32>
    %199 = tpu.matmul %196, %4, %cst_91 {dimension_numbers = #tpu.dot_dimension_numbers<[2], [1], [1], [2], [0, 0, 0, 1, 1, 2], [0], [0]>} : vector<2x1x8xf32>, vector<2x8x32xf32>, vector<2x1x32xf32> -> vector<2x1x32xf32>
    "tpu.trace_stop"() : () -> ()
    %200 = vector.shape_cast %199 : vector<2x1x32xf32> to vector<2x32xf32>
    %cst_92 = arith.constant dense<0.000000e+00> : vector<2x32xf32>
    %201 = tpu.matmul %198, %8, %cst_92 {dimension_numbers = #tpu.dot_dimension_numbers<[1], [0], [0], [1], [0, 0, 1, 1], [], []>} : vector<2x32xf32>, vector<32x32xf32>, vector<2x32xf32> -> vector<2x32xf32>
    %cst_93 = arith.constant dense<0.000000e+00> : vector<2x32xf32>
    %202 = tpu.matmul %200, %10, %cst_93 {dimension_numbers = #tpu.dot_dimension_numbers<[1], [0], [0], [1], [0, 0, 1, 1], [], []>} : vector<2x32xf32>, vector<32x32xf32>, vector<2x32xf32> -> vector<2x32xf32>
    %203 = arith.addf %201, %202 : vector<2x32xf32>
    %cst_94 = arith.constant dense<0.000000e+00> : vector<2x32xf32>
    %204 = tpu.matmul %179, %12, %cst_94 {dimension_numbers = #tpu.dot_dimension_numbers<[1], [0], [0], [1], [0, 0, 1, 1], [], []>} : vector<2x32xf32>, vector<32x32xf32>, vector<2x32xf32> -> vector<2x32xf32>
    %205 = arith.addf %203, %204 : vector<2x32xf32>
    %206 = math.tanh %205 : vector<2x32xf32>
    %c2_95 = arith.constant 2 : index
    %c0_96 = arith.constant 0 : index
    %c0_97 = arith.constant 0 : index
    %207 = vector.load %arg10[%c2_95, %c0_96, %c0_97] : memref<4x2x32xf32, #tpu.memory_space<vmem>>, vector<1x2x32xf32>
    %208 = vector.shape_cast %207 : vector<1x2x32xf32> to vector<2x32xf32>
    %209 = vector.shape_cast %206 : vector<2x32xf32> to vector<1x2x32xf32>
    tpu.vector_store %arg10[%c2_95, %c0_96, %c0_97], %209 {strides = array<i32>} : memref<4x2x32xf32, #tpu.memory_space<vmem>>, vector<1x2x32xf32>,
    %c3 = arith.constant 3 : index
    %c0_98 = arith.constant 0 : index
    %c0_99 = arith.constant 0 : index
    %210 = vector.load %arg2[%c3, %c0_98, %c0_99] : memref<4x2x128xf32, #tpu.memory_space<vmem>>, vector<1x2x128xf32>
    %211 = vector.shape_cast %210 : vector<1x2x128xf32> to vector<2x128xf32>
    %cst_100 = arith.constant dense<0.000000e+00> : vector<2x128xf32>
    %212 = tpu.matmul %206, %5, %cst_100 {dimension_numbers = #tpu.dot_dimension_numbers<[1], [0], [0], [1], [0, 0, 1, 1], [], []>} : vector<2x32xf32>, vector<32x128xf32>, vector<2x128xf32> -> vector<2x128xf32>
    %213 = arith.addf %211, %212 : vector<2x128xf32>
    %214 = vector.extract_strided_slice %213 {offsets = [0, 0], sizes = [2, 32], strides = [1, 1]} : vector<2x128xf32> to vector<2x32xf32>
    %cst_101 = arith.constant 5.000000e-01 : f32
    %215 = vector.broadcast %cst_101 : f32 to vector<2x32xf32>
    %216 = arith.mulf %215, %214 : vector<2x32xf32>
    %217 = math.tanh %216 : vector<2x32xf32>
    %cst_102 = arith.constant 1.000000e+00 : f32
    %218 = vector.broadcast %cst_102 : f32 to vector<2x32xf32>
    %219 = arith.addf %217, %218 : vector<2x32xf32>
    %cst_103 = arith.constant 5.000000e-01 : f32
    %220 = vector.broadcast %cst_103 : f32 to vector<2x32xf32>
    %221 = arith.mulf %220, %219 : vector<2x32xf32>
    %222 = vector.extract_strided_slice %213 {offsets = [0, 32], sizes = [2, 32], strides = [1, 1]} : vector<2x128xf32> to vector<2x32xf32>
    %cst_104 = arith.constant 5.000000e-01 : f32
    %223 = vector.broadcast %cst_104 : f32 to vector<2x32xf32>
    %224 = arith.mulf %223, %222 : vector<2x32xf32>
    %225 = math.tanh %224 : vector<2x32xf32>
    %cst_105 = arith.constant 1.000000e+00 : f32
    %226 = vector.broadcast %cst_105 : f32 to vector<2x32xf32>
    %227 = arith.addf %225, %226 : vector<2x32xf32>
    %cst_106 = arith.constant 5.000000e-01 : f32
    %228 = vector.broadcast %cst_106 : f32 to vector<2x32xf32>
    %229 = arith.mulf %228, %227 : vector<2x32xf32>
    %230 = vector.extract_strided_slice %213 {offsets = [0, 64], sizes = [2, 32], strides = [1, 1]} : vector<2x128xf32> to vector<2x32xf32>
    %231 = math.tanh %230 : vector<2x32xf32>
    %232 = vector.extract_strided_slice %213 {offsets = [0, 96], sizes = [2, 32], strides = [1, 1]} : vector<2x128xf32> to vector<2x32xf32>
    %cst_107 = arith.constant 5.000000e-01 : f32
    %233 = vector.broadcast %cst_107 : f32 to vector<2x32xf32>
    %234 = arith.mulf %233, %232 : vector<2x32xf32>
    %235 = math.tanh %234 : vector<2x32xf32>
    %cst_108 = arith.constant 1.000000e+00 : f32
    %236 = vector.broadcast %cst_108 : f32 to vector<2x32xf32>
    %237 = arith.addf %235, %236 : vector<2x32xf32>
    %cst_109 = arith.constant 5.000000e-01 : f32
    %238 = vector.broadcast %cst_109 : f32 to vector<2x32xf32>
    %239 = arith.mulf %238, %237 : vector<2x32xf32>
    %240 = arith.mulf %229, %177 : vector<2x32xf32>
    %241 = arith.mulf %221, %231 : vector<2x32xf32>
    %242 = arith.addf %240, %241 : vector<2x32xf32>
    %243 = math.tanh %242 : vector<2x32xf32>
    %244 = arith.mulf %239, %243 : vector<2x32xf32>
    %cst_110 = arith.constant dense<0.000000e+00> : vector<2x32xf32>
    %245 = tpu.matmul %244, %6, %cst_110 {dimension_numbers = #tpu.dot_dimension_numbers<[1], [0], [0], [1], [0, 0, 1, 1], [], []>} : vector<2x32xf32>, vector<32x32xf32>, vector<2x32xf32> -> vector<2x32xf32>
    %246 = vector.shape_cast %245 : vector<2x32xf32> to vector<2x1x32xf32>
    "tpu.trace_start"() <{level = 10 : i32, message = "bqh,blh->bql"}> : () -> ()
    %cst_111 = arith.constant dense<0.000000e+00> : vector<2x1x8xf32>
    %247 = tpu.matmul %246, %3, %cst_111 {dimension_numbers = #tpu.dot_dimension_numbers<[2], [2], [1], [1], [0, 0, 0, 1, 1, 1], [0], [0]>} : vector<2x1x32xf32>, vector<2x8x32xf32>, vector<2x1x8xf32> -> vector<2x1x8xf32>
    "tpu.trace_stop"() : () -> ()
    %cst_112 = arith.constant dense<0xFF800000> : vector<2x1xf32>
    %248 = vector.multi_reduction <maximumf>, %247, %cst_112 [2] : vector<2x1x8xf32> to vector<2x1xf32>
    %249 = vector.shape_cast %248 : vector<2x1xf32> to vector<2x1x1xf32>
    %250 = vector.broadcast %249 : vector<2x1x1xf32> to vector<2x1x8xf32>
    %251 = arith.subf %247, %250 : vector<2x1x8xf32>
    %252 = math.exp %251 : vector<2x1x8xf32>
    %cst_113 = arith.constant dense<0.000000e+00> : vector<2x1xf32>
    %253 = vector.multi_reduction <add>, %252, %cst_113 [2] : vector<2x1x8xf32> to vector<2x1xf32>
    %254 = vector.shape_cast %253 : vector<2x1xf32> to vector<2x1x1xf32>
    %255 = tpu.reciprocal %254 {approx = true} : vector<2x1x1xf32> -> vector<2x1x1xf32>
    %256 = arith.mulf %254, %255 : vector<2x1x1xf32>
    %cst_114 = arith.constant 2.000000e+00 : f32
    %257 = vector.broadcast %cst_114 : f32 to vector<2x1x1xf32>
    %258 = arith.subf %257, %256 : vector<2x1x1xf32>
    %259 = arith.mulf %255, %258 : vector<2x1x1xf32>
    %260 = vector.broadcast %259 : vector<2x1x1xf32> to vector<2x1x8xf32>
    %261 = arith.mulf %252, %260 : vector<2x1x8xf32>
    "tpu.trace_start"() <{level = 10 : i32, message = "bql,blh->bqh"}> : () -> ()
    %cst_115 = arith.constant dense<0.000000e+00> : vector<2x1x32xf32>
    %262 = tpu.matmul %261, %3, %cst_115 {dimension_numbers = #tpu.dot_dimension_numbers<[2], [1], [1], [2], [0, 0, 0, 1, 1, 2], [0], [0]>} : vector<2x1x8xf32>, vector<2x8x32xf32>, vector<2x1x32xf32> -> vector<2x1x32xf32>
    "tpu.trace_stop"() : () -> ()
    %263 = vector.shape_cast %262 : vector<2x1x32xf32> to vector<2x32xf32>
    "tpu.trace_start"() <{level = 10 : i32, message = "bql,blh->bqh"}> : () -> ()
    %cst_116 = arith.constant dense<0.000000e+00> : vector<2x1x32xf32>
    %264 = tpu.matmul %261, %4, %cst_116 {dimension_numbers = #tpu.dot_dimension_numbers<[2], [1], [1], [2], [0, 0, 0, 1, 1, 2], [0], [0]>} : vector<2x1x8xf32>, vector<2x8x32xf32>, vector<2x1x32xf32> -> vector<2x1x32xf32>
    "tpu.trace_stop"() : () -> ()
    %265 = vector.shape_cast %264 : vector<2x1x32xf32> to vector<2x32xf32>
    %cst_117 = arith.constant dense<0.000000e+00> : vector<2x32xf32>
    %266 = tpu.matmul %263, %8, %cst_117 {dimension_numbers = #tpu.dot_dimension_numbers<[1], [0], [0], [1], [0, 0, 1, 1], [], []>} : vector<2x32xf32>, vector<32x32xf32>, vector<2x32xf32> -> vector<2x32xf32>
    %cst_118 = arith.constant dense<0.000000e+00> : vector<2x32xf32>
    %267 = tpu.matmul %265, %10, %cst_118 {dimension_numbers = #tpu.dot_dimension_numbers<[1], [0], [0], [1], [0, 0, 1, 1], [], []>} : vector<2x32xf32>, vector<32x32xf32>, vector<2x32xf32> -> vector<2x32xf32>
    %268 = arith.addf %266, %267 : vector<2x32xf32>
    %cst_119 = arith.constant dense<0.000000e+00> : vector<2x32xf32>
    %269 = tpu.matmul %244, %12, %cst_119 {dimension_numbers = #tpu.dot_dimension_numbers<[1], [0], [0], [1], [0, 0, 1, 1], [], []>} : vector<2x32xf32>, vector<32x32xf32>, vector<2x32xf32> -> vector<2x32xf32>
    %270 = arith.addf %268, %269 : vector<2x32xf32>
    %271 = math.tanh %270 : vector<2x32xf32>
    %c3_120 = arith.constant 3 : index
    %c0_121 = arith.constant 0 : index
    %c0_122 = arith.constant 0 : index
    %272 = vector.load %arg10[%c3_120, %c0_121, %c0_122] : memref<4x2x32xf32, #tpu.memory_space<vmem>>, vector<1x2x32xf32>
    %273 = vector.shape_cast %272 : vector<1x2x32xf32> to vector<2x32xf32>
    %274 = vector.shape_cast %271 : vector<2x32xf32> to vector<1x2x32xf32>
    tpu.vector_store %arg10[%c3_120, %c0_121, %c0_122], %274 {strides = array<i32>} : memref<4x2x32xf32, #tpu.memory_space<vmem>>, vector<1x2x32xf32>,
    %c0_123 = arith.constant 0 : index
    %c0_124 = arith.constant 0 : index
    %275 = vector.load %arg13[%c0_123, %c0_124] : memref<2x32xf32, #tpu.memory_space<vmem>>, vector<2x32xf32>
    tpu.vector_store %arg13[%c0_123, %c0_124], %271 {strides = array<i32>} : memref<2x32xf32, #tpu.memory_space<vmem>>, vector<2x32xf32>,
    %c0_125 = arith.constant 0 : index
    %c0_126 = arith.constant 0 : index
    %276 = vector.load %arg14[%c0_125, %c0_126] : memref<2x32xf32, #tpu.memory_space<vmem>>, vector<2x32xf32>
    tpu.vector_store %arg14[%c0_125, %c0_126], %242 {strides = array<i32>} : memref<2x32xf32, #tpu.memory_space<vmem>>, vector<2x32xf32>,
    %c0_i32_127 = arith.constant 0 : i32
    %277 = arith.cmpi eq, %arg1, %c0_i32_127 : i32
    %278 = arith.extui %277 : i1 to i32
    %c0_i32_128 = arith.constant 0 : i32
    %279 = arith.cmpi ne, %278, %c0_i32_128 : i32
    scf.if %279 {
      %c0_129 = arith.constant 0 : index
      %c0_130 = arith.constant 0 : index
      %280 = vector.load %arg11[%c0_129, %c0_130] : memref<2x32xf32, #tpu.memory_space<vmem>>, vector<2x32xf32>
      tpu.vector_store %arg11[%c0_129, %c0_130], %271 {strides = array<i32>} : memref<2x32xf32, #tpu.memory_space<vmem>>, vector<2x32xf32>,
      %c0_131 = arith.constant 0 : index
      %c0_132 = arith.constant 0 : index
      %281 = vector.load %arg12[%c0_131, %c0_132] : memref<2x32xf32, #tpu.memory_space<vmem>>, vector<2x32xf32>
      tpu.vector_store %arg12[%c0_131, %c0_132], %242 {strides = array<i32>} : memref<2x32xf32, #tpu.memory_space<vmem>>, vector<2x32xf32>,
    } else {
    }
    return
  }
  func.func @transform_0(%arg0: i32, %arg1: i32) -> (i32, i32, i32) {
    %c0_i32 = arith.constant 0 : i32
    %c0_i32_0 = arith.constant 0 : i32
    return %arg1, %arg0, %c0_i32 : i32, i32, i32
  }
  func.func @transform_1(%arg0: i32, %arg1: i32) -> (i32, i32) {
    %c0_i32 = arith.constant 0 : i32
    %c0_i32_0 = arith.constant 0 : i32
    return %arg0, %c0_i32 : i32, i32
  }
  func.func @transform_2(%arg0: i32, %arg1: i32) -> (i32, i32) {
    %c0_i32 = arith.constant 0 : i32
    %c0_i32_0 = arith.constant 0 : i32
    return %arg0, %c0_i32 : i32, i32
  }
  func.func @transform_3(%arg0: i32, %arg1: i32) -> (i32, i32, i32) {
    %c0_i32 = arith.constant 0 : i32
    %c0_i32_0 = arith.constant 0 : i32
    %c0_i32_1 = arith.constant 0 : i32
    return %arg0, %c0_i32, %c0_i32_0 : i32, i32, i32
  }
  func.func @transform_4(%arg0: i32, %arg1: i32) -> (i32, i32, i32) {
    %c0_i32 = arith.constant 0 : i32
    %c0_i32_0 = arith.constant 0 : i32
    %c0_i32_1 = arith.constant 0 : i32
    return %arg0, %c0_i32, %c0_i32_0 : i32, i32, i32
  }
  func.func @transform_5(%arg0: i32, %arg1: i32) -> (i32, i32) {
    %c0_i32 = arith.constant 0 : i32
    %c0_i32_0 = arith.constant 0 : i32
    %c0_i32_1 = arith.constant 0 : i32
    return %c0_i32, %c0_i32_0 : i32, i32
  }
  func.func @transform_6(%arg0: i32, %arg1: i32) -> (i32, i32) {
    %c0_i32 = arith.constant 0 : i32
    %c0_i32_0 = arith.constant 0 : i32
    %c0_i32_1 = arith.constant 0 : i32
    return %c0_i32, %c0_i32_0 : i32, i32
  }
  func.func @transform_7(%arg0: i32, %arg1: i32) -> (i32, i32, i32) {
    %c0_i32 = arith.constant 0 : i32
    %c0_i32_0 = arith.constant 0 : i32
    %c0_i32_1 = arith.constant 0 : i32
    %c0_i32_2 = arith.constant 0 : i32
    return %c0_i32, %c0_i32_0, %c0_i32_1 : i32, i32, i32
  }
  func.func @transform_8(%arg0: i32, %arg1: i32) -> (i32, i32, i32) {
    %c0_i32 = arith.constant 0 : i32
    %c0_i32_0 = arith.constant 0 : i32
    return %arg1, %arg0, %c0_i32 : i32, i32, i32
  }
  func.func @transform_9(%arg0: i32, %arg1: i32) -> (i32, i32) {
    %c0_i32 = arith.constant 0 : i32
    %c0_i32_0 = arith.constant 0 : i32
    return %arg0, %c0_i32 : i32, i32
  }
  func.func @transform_10(%arg0: i32, %arg1: i32) -> (i32, i32) {
    %c0_i32 = arith.constant 0 : i32
    %c0_i32_0 = arith.constant 0 : i32
    return %arg0, %c0_i32 : i32, i32
  }
}

</mosaic_0001>

<llo_original>
// kernel: tpu_custom_call.1
$region0: #{tpu_custom_call.1}
  #allocation0 [shape = 'u32[]', space=smem, size = 0x4, offset = 0x4, fixed_abs, tag = 'smem constant byte address 0x4 - core index']
  #allocation1 [shape = 'u32[72,128]{1,0:T(1,128)}', space=vmem, size = 0x9000, scoped, tag = 'internal scratch']
  #allocation2 [shape = 'f32[2,32]{1,0:T(2,128)}', space=vmem, size = 0x400, scoped, tag = 'scratch operand']
  #allocation3 [shape = 'f32[2,32]{1,0:T(2,128)}', space=vmem, size = 0x400, scoped, tag = 'scratch operand']
  %s0 = inlined_call_operand.hbm [shape: f32[4,2,128], index: 0, kind: input, shape index: {}]
  %s1 = inlined_call_operand.hbm [shape: f32[2,32], index: 1, kind: input, shape index: {}]
  %s2 = inlined_call_operand.hbm [shape: f32[2,32], index: 2, kind: input, shape index: {}]
  %s3 = inlined_call_operand.hbm [shape: f32[2,8,32], index: 3, kind: input, shape index: {}]
  %s4 = inlined_call_operand.hbm [shape: f32[2,8,32], index: 4, kind: input, shape index: {}]
  %s5 = inlined_call_operand.hbm [shape: f32[32,128], index: 5, kind: input, shape index: {}]
  %s6 = inlined_call_operand.hbm [shape: f32[32,32], index: 6, kind: input, shape index: {}]
  %s7 = inlined_call_operand.hbm [shape: f32[3,32,32], index: 7, kind: input, shape index: {}]
  %s8 = inlined_call_operand.hbm [shape: f32[4,2,32], index: 8, kind: output, shape index: {0}]
  %s9 = inlined_call_operand.hbm [shape: f32[2,32], index: 9, kind: output, shape index: {1}]
  %s10 = inlined_call_operand.hbm [shape: f32[2,32], index: 10, kind: output, shape index: {2}]
  %11 = xla_tuple %s8, %s9, %s10
  %s12 = sld [smem:[#allocation0]]
  $region98: #{tpu_custom_call.1} parent=0
    _
  %s14 = ssub.s32 1, %s12
  %s15 = scalar_select 0, %s14, %s12
  $region1: #{tpu_custom_call.1} parent=0
    #allocation4 [shape = 'u8[4096]{0}', space=vmem, size = 0x1000, scoped, tag = 'input window, operand 0, single buffered']
    #allocation5 [shape = 's32[1]{0}', space=sflag, size = 0x4, scoped, tag = 'scoped memory for tpu_custom_call.1']
    #allocation6 [shape = 's32[1]{0}', space=sflag, size = 0x4, scoped, tag = 'scoped memory for tpu_custom_call.1']
    #allocation7 [shape = 'u8[1024]{0}', space=vmem, size = 0x400, scoped, tag = 'input window, operand 1, single buffered']
    #allocation8 [shape = 's32[1]{0}', space=sflag, size = 0x4, scoped, tag = 'scoped memory for tpu_custom_call.1']
    #allocation9 [shape = 'u8[1024]{0}', space=vmem, size = 0x400, scoped, tag = 'input window, operand 2, single buffered']
    #allocation10 [shape = 'u8[8192]{0}', space=vmem, size = 0x2000, scoped, tag = 'input window, operand 3, single buffered']
    #allocation11 [shape = 's32[1]{0}', space=sflag, size = 0x4, scoped, tag = 'scoped memory for tpu_custom_call.1']
    #allocation12 [shape = 'u8[8192]{0}', space=vmem, size = 0x2000, scoped, tag = 'input window, operand 4, single buffered']
    #allocation13 [shape = 'u8[16384]{0}', space=vmem, size = 0x4000, scoped, tag = 'input window, operand 5, single buffered']
    #allocation14 [shape = 's32[1]{0}', space=sflag, size = 0x4, scoped, tag = 'scoped memory for tpu_custom_call.1']
    #allocation15 [shape = 'u8[16384]{0}', space=vmem, size = 0x4000, scoped, tag = 'input window, operand 6, single buffered']
    #allocation16 [shape = 'u8[49152]{0}', space=vmem, size = 0xc000, scoped, tag = 'input window, operand 7, single buffered']
    #allocation17 [shape = 's32[1]{0}', space=sflag, size = 0x4, scoped, tag = 'scoped memory for tpu_custom_call.1']
    #allocation18 [shape = 'u8[4096]{0}', space=vmem, size = 0x1000, scoped, tag = 'output window, operand 0, single buffered']
    #allocation19 [shape = 'u8[1024]{0}', space=vmem, size = 0x400, scoped, tag = 'output window, operand 1, single buffered']
    #allocation20 [shape = 's32[1]{0}', space=sflag, size = 0x4, scoped, tag = 'scoped memory for tpu_custom_call.1']
    #allocation21 [shape = 'u8[1024]{0}', space=vmem, size = 0x400, scoped, tag = 'output window, operand 2, single buffered']
    %16 = vsyncpa [#allocation5], 0
    %17 = vsyncpa [#allocation8], 0
    %18 = vsyncpa [#allocation11], 0
    %19 = vsyncpa [#allocation14], 0
    %20 = vsyncpa [#allocation17], 0
    %21 = vsyncpa [#allocation6], 0
    %22 = vsyncpa [#allocation20], 0
    // Predicated region
    $region2: #{tpu_custom_call.1} parent=1 // pred_check
      _
    $region3: #{tpu_custom_call.1} parent=1 // pred_check_branch
      %24 = sbr.rel (0) target = $region5
    $region4: #{tpu_custom_call.1} parent=1 // pred_region
      %26 = vsyncadd [#allocation5], 0
      %s27 = sshll.u32 %s0, 4
      %s28 = int_to_ptr.hbm [resolvable:$true] %s27
      %s29 = sshll.u32 [#allocation4], 4
      %s30 = int_to_ptr.vmem [resolvable:$true] %s29
      %35 = dma.hbm_to_vmem [thread:$0]  %s28, 128, %s30, [#allocation5], 32, 32, 2
    $region5: #{tpu_custom_call.1} parent=1 // pred_fallthru
      _
    // Predicated region
    $region6: #{tpu_custom_call.1} parent=1 // pred_check
      _
    $region7: #{tpu_custom_call.1} parent=1 // pred_check_branch
      %37 = sbr.rel (0) target = $region9
    $region8: #{tpu_custom_call.1} parent=1 // pred_region
      %39 = vsyncadd [#allocation8], 0
      %s41 = sshll.u32 %s1, 4
      %s42 = int_to_ptr.hbm [resolvable:$true] %s41
      %s43 = sshll.u32 [#allocation7], 4
      %s44 = int_to_ptr.vmem [resolvable:$true] %s43
      %46 = dma.hbm_to_vmem [thread:$0]  %s42, 32, %s44, [#allocation8]
    $region9: #{tpu_custom_call.1} parent=1 // pred_fallthru
      _
    // Predicated region
    $region10: #{tpu_custom_call.1} parent=1 // pred_check
      _
    $region11: #{tpu_custom_call.1} parent=1 // pred_check_branch
      %48 = sbr.rel (0) target = $region13
    $region12: #{tpu_custom_call.1} parent=1 // pred_region
      %50 = vsyncadd [#allocation8], 0
      %s52 = sshll.u32 %s2, 4
      %s53 = int_to_ptr.hbm [resolvable:$true] %s52
      %s54 = sshll.u32 [#allocation9], 4
      %s55 = int_to_ptr.vmem [resolvable:$true] %s54
      %57 = dma.hbm_to_vmem [thread:$0]  %s53, 32, %s55, [#allocation8]
    $region13: #{tpu_custom_call.1} parent=1 // pred_fallthru
      _
    // Predicated region
    $region14: #{tpu_custom_call.1} parent=1 // pred_check
      _
    $region15: #{tpu_custom_call.1} parent=1 // pred_check_branch
      %59 = sbr.rel (0) target = $region17
    $region16: #{tpu_custom_call.1} parent=1 // pred_region
      %61 = vsyncadd [#allocation11], 0
      %s62 = sshll.u32 %s3, 4
      %s63 = int_to_ptr.hbm [resolvable:$true] %s62
      %s64 = sshll.u32 [#allocation10], 4
      %s65 = int_to_ptr.vmem [resolvable:$true] %s64
      %70 = dma.hbm_to_vmem [thread:$0]  %s63, 256, %s65, [#allocation11], 128, 128, 8
    $region17: #{tpu_custom_call.1} parent=1 // pred_fallthru
      _
    // Predicated region
    $region18: #{tpu_custom_call.1} parent=1 // pred_check
      _
    $region19: #{tpu_custom_call.1} parent=1 // pred_check_branch
      %72 = sbr.rel (0) target = $region21
    $region20: #{tpu_custom_call.1} parent=1 // pred_region
      %74 = vsyncadd [#allocation11], 0
      %s75 = sshll.u32 %s4, 4
      %s76 = int_to_ptr.hbm [resolvable:$true] %s75
      %s77 = sshll.u32 [#allocation12], 4
      %s78 = int_to_ptr.vmem [resolvable:$true] %s77
      %83 = dma.hbm_to_vmem [thread:$0]  %s76, 256, %s78, [#allocation11], 128, 128, 8
    $region21: #{tpu_custom_call.1} parent=1 // pred_fallthru
      _
    // Predicated region
    $region22: #{tpu_custom_call.1} parent=1 // pred_check
      _
    $region23: #{tpu_custom_call.1} parent=1 // pred_check_branch
      %85 = sbr.rel (0) target = $region25
    $region24: #{tpu_custom_call.1} parent=1 // pred_region
      %87 = vsyncadd [#allocation14], 0
      %s88 = sshll.u32 %s5, 4
      %s89 = int_to_ptr.hbm [resolvable:$true] %s88
      %s90 = sshll.u32 [#allocation13], 4
      %s91 = int_to_ptr.vmem [resolvable:$true] %s90
      %96 = dma.hbm_to_vmem [thread:$0]  %s89, 512, %s91, [#allocation14], 128, 128, 8
    $region25: #{tpu_custom_call.1} parent=1 // pred_fallthru
      _
    // Predicated region
    $region26: #{tpu_custom_call.1} parent=1 // pred_check
      _
    $region27: #{tpu_custom_call.1} parent=1 // pred_check_branch
      %98 = sbr.rel (0) target = $region29
    $region28: #{tpu_custom_call.1} parent=1 // pred_region
      %100 = vsyncadd [#allocation14], 0
      %s101 = sshll.u32 %s6, 4
      %s102 = int_to_ptr.hbm [resolvable:$true] %s101
      %s103 = sshll.u32 [#allocation15], 4
      %s104 = int_to_ptr.vmem [resolvable:$true] %s103
      %109 = dma.hbm_to_vmem [thread:$0]  %s102, 512, %s104, [#allocation14], 128, 128, 8
    $region29: #{tpu_custom_call.1} parent=1 // pred_fallthru
      _
    // Predicated region
    $region30: #{tpu_custom_call.1} parent=1 // pred_check
      _
    $region31: #{tpu_custom_call.1} parent=1 // pred_check_branch
      %111 = sbr.rel (0) target = $region33
    $region32: #{tpu_custom_call.1} parent=1 // pred_region
      %113 = vsyncadd [#allocation17], 0
      %s114 = sshll.u32 %s7, 4
      %s115 = int_to_ptr.hbm [resolvable:$true] %s114
      %s116 = sshll.u32 [#allocation16], 4
      %s117 = int_to_ptr.vmem [resolvable:$true] %s116
      %122 = dma.hbm_to_vmem [thread:$0]  %s115, 1536, %s117, [#allocation17], 128, 128, 8
    $region33: #{tpu_custom_call.1} parent=1 // pred_fallthru
      _
    // Predicated region
    $region34: #{tpu_custom_call.1} parent=1 // pred_check
      _
    $region35: #{tpu_custom_call.1} parent=1 // pred_check_branch
      %124 = sbr.rel (0) target = $region37
    $region36: #{tpu_custom_call.1} parent=1 // pred_region
      %126 = dma.done [#allocation5], 128
    $region37: #{tpu_custom_call.1} parent=1 // pred_fallthru
      _
    // Predicated region
    $region38: #{tpu_custom_call.1} parent=1 // pred_check
      _
    $region39: #{tpu_custom_call.1} parent=1 // pred_check_branch
      %128 = sbr.rel (0) target = $region41
    $region40: #{tpu_custom_call.1} parent=1 // pred_region
      %130 = dma.done [#allocation8], 32
    $region41: #{tpu_custom_call.1} parent=1 // pred_fallthru
      _
    // Predicated region
    $region42: #{tpu_custom_call.1} parent=1 // pred_check
      _
    $region43: #{tpu_custom_call.1} parent=1 // pred_check_branch
      %132 = sbr.rel (0) target = $region45
    $region44: #{tpu_custom_call.1} parent=1 // pred_region
      %134 = dma.done [#allocation8], 32
    $region45: #{tpu_custom_call.1} parent=1 // pred_fallthru
      _
    // Predicated region
    $region46: #{tpu_custom_call.1} parent=1 // pred_check
      _
    $region47: #{tpu_custom_call.1} parent=1 // pred_check_branch
      %136 = sbr.rel (0) target = $region49
    $region48: #{tpu_custom_call.1} parent=1 // pred_region
      %138 = dma.done [#allocation11], 256
    $region49: #{tpu_custom_call.1} parent=1 // pred_fallthru
      _
    // Predicated region
    $region50: #{tpu_custom_call.1} parent=1 // pred_check
      _
    $region51: #{tpu_custom_call.1} parent=1 // pred_check_branch
      %140 = sbr.rel (0) target = $region53
    $region52: #{tpu_custom_call.1} parent=1 // pred_region
      %142 = dma.done [#allocation11], 256
    $region53: #{tpu_custom_call.1} parent=1 // pred_fallthru
      _
    // Predicated region
    $region54: #{tpu_custom_call.1} parent=1 // pred_check
      _
    $region55: #{tpu_custom_call.1} parent=1 // pred_check_branch
      %144 = sbr.rel (0) target = $region57
    $region56: #{tpu_custom_call.1} parent=1 // pred_region
      %146 = dma.done [#allocation14], 512
    $region57: #{tpu_custom_call.1} parent=1 // pred_fallthru
      _
    // Predicated region
    $region58: #{tpu_custom_call.1} parent=1 // pred_check
      _
    $region59: #{tpu_custom_call.1} parent=1 // pred_check_branch
      %148 = sbr.rel (0) target = $region61
    $region60: #{tpu_custom_call.1} parent=1 // pred_region
      %150 = dma.done [#allocation14], 512
    $region61: #{tpu_custom_call.1} parent=1 // pred_fallthru
      _
    // Predicated region
    $region62: #{tpu_custom_call.1} parent=1 // pred_check
      _
    $region63: #{tpu_custom_call.1} parent=1 // pred_check_branch
      %152 = sbr.rel (0) target = $region65
    $region64: #{tpu_custom_call.1} parent=1 // pred_region
      %154 = dma.done [#allocation17], 1536
    $region65: #{tpu_custom_call.1} parent=1 // pred_fallthru
      _
    %p155 = scmp.eq.s32.totalorder 0, 0
    // Predicated region
    $region66: #{tpu_custom_call.1} parent=1 // pred_check
      %p156 = pneg %p155
    $region67: #{tpu_custom_call.1} parent=1 // pred_check_branch
      %158 = sbr.rel (%p156) target = $region69
    $region68: #{tpu_custom_call.1} parent=1 // pred_region
      %v159 = vld [vmem:[#allocation7] sm:$0x3]
      %vm160 = vcmask 254976
      %161 = vst.msk [vmem:[#allocation2] sm:$0x3] %vm160, %v159
      %v162 = vld [vmem:[#allocation9] sm:$0x3]
      %163 = vst.msk [vmem:[#allocation3] sm:$0x3] %vm160, %v162
    $region69: #{tpu_custom_call.1} parent=1 // pred_fallthru
      _
    %v164 = vld [vmem:[#allocation10] sm:$0xff]
    %v165 = vld [vmem:[#allocation10 + $0x8] sm:$0xff]
    %v166 = vld [vmem:[#allocation12] sm:$0xff]
    %v167 = vld [vmem:[#allocation12 + $0x8] sm:$0xff]
    %v168 = vld [vmem:[#allocation13] sm:$0xff]
    %v169 = vld [vmem:[#allocation13 + $0x8] sm:$0xff]
    %v170 = vld [vmem:[#allocation13 + $0x10] sm:$0xff]
    %v171 = vld [vmem:[#allocation13 + $0x18] sm:$0xff]
    %v172 = vld [vmem:[#allocation15] sm:$0xff]
    %v173 = vld [vmem:[#allocation15 + $0x8] sm:$0xff]
    %v174 = vld [vmem:[#allocation15 + $0x10] sm:$0xff]
    %v175 = vld [vmem:[#allocation15 + $0x18] sm:$0xff]
    %v176 = vld [vmem:[#allocation16] sm:$0xff]
    %v177 = vld [vmem:[#allocation16 + $0x8] sm:$0xff]
    %v178 = vld [vmem:[#allocation16 + $0x10] sm:$0xff]
    %v179 = vld [vmem:[#allocation16 + $0x18] sm:$0xff]
    %s180 = scalar_lea.vmem [#allocation16], 32
    %v181 = vld [vmem:[%s180] sm:$0xff]
    %v182 = vld [vmem:[%s180 + $0x8] sm:$0xff]
    %v183 = vld [vmem:[%s180 + $0x10] sm:$0xff]
    %v184 = vld [vmem:[%s180 + $0x18] sm:$0xff]
    %s185 = scalar_lea.vmem [#allocation16], 64
    %v186 = vld [vmem:[%s185] sm:$0xff]
    %v187 = vld [vmem:[%s185 + $0x8] sm:$0xff]
    %v188 = vld [vmem:[%s185 + $0x10] sm:$0xff]
    %v189 = vld [vmem:[%s185 + $0x18] sm:$0xff]
    %v190 = vld [vmem:[#allocation2] sm:$0x3]
    %v191 = vld [vmem:[#allocation3] sm:$0x3]
    %v192 = vld [vmem:[#allocation4] sm:$0x3]
    %vm193 = vcmask 261120
    %v195 = vsel %vm193, %v190, 0
    %197 = vmatpush.msra.mxu0 0.0
    %198 = vmatpush.msra.mxu0 0.0
    %199 = vmatpush.msra.mxu0 0.0
    %200 = vmatpush.msra.mxu0 0.0
    %201 = vmatpush.msra.mxu0 0.0
    %202 = vmatpush.msra.mxu0 0.0
    %203 = vmatpush.msra.mxu0 0.0
    %204 = vmatpush.msra.mxu0 0.0
    %205 = vmatpush.msra.mxu0 0.0
    %206 = vmatpush.msra.mxu0 0.0
    %207 = vmatpush.msra.mxu0 0.0
    %208 = vmatpush.msra.mxu0 0.0
    %209 = vmatpush.msra.mxu0 %v171
    %210 = vmatpush.msra.mxu0 %v170
    %211 = vmatpush.msra.mxu0 %v169
    %212 = vmatpush.msra.mxu0 %v168
    %213 = vmatmul.f32.gmra.mxu0 %v195
    %v214 = vpop.f32.mrf.mxu0
    %v215 = vadd.f32 0.0, %v214
    %216 = vdwg.mxu0
    %v217 = vadd.f32 %v192, %v215
    %v218 = vmul.f32 %v217, 0.5
    %v219 = vtanh.pop %v218
    %v220 = vadd.f32 %v219, 1.0
    %v221 = vmul.f32 %v220, 0.5
    %v222 = vtanh.pop %v217
    %224 = vrot.lane.b32.xlu0 %v191, 32
    %v225 = vpop.permute.xlu0 %224
    %v227 = vmul.f32 %v221, %v225
    %229 = vrot.lane.b32.xlu0 %v222, 64
    %v230 = vpop.permute.xlu0 %229
    %v232 = vmul.f32 %v221, %v230
    %234 = vrot.lane.b32.xlu0 %v232, 32
    %v235 = vpop.permute.xlu0 %234
    %v237 = vadd.f32 %v227, %v235
    %v238 = vtanh.pop %v237
    %240 = vrot.lane.b32.xlu0 %v238, 64
    %v241 = vpop.permute.xlu0 %240
    %v243 = vmul.f32 %v221, %v241
    %245 = vrot.lane.b32.xlu0 %v243, 32
    %v246 = vpop.permute.xlu0 %245
    %v247 = vsel %vm193, %v246, 0
    %249 = vmatpush.msra.mxu0 0.0
    %250 = vmatpush.msra.mxu0 0.0
    %251 = vmatpush.msra.mxu0 0.0
    %252 = vmatpush.msra.mxu0 0.0
    %253 = vmatpush.msra.mxu0 0.0
    %254 = vmatpush.msra.mxu0 0.0
    %255 = vmatpush.msra.mxu0 0.0
    %256 = vmatpush.msra.mxu0 0.0
    %257 = vmatpush.msra.mxu0 0.0
    %258 = vmatpush.msra.mxu0 0.0
    %259 = vmatpush.msra.mxu0 0.0
    %260 = vmatpush.msra.mxu0 0.0
    %261 = vmatpush.msra.mxu0 %v175
    %262 = vmatpush.msra.mxu0 %v174
    %263 = vmatpush.msra.mxu0 %v173
    %264 = vmatpush.msra.mxu0 %v172
    %265 = vmatmul.f32.gmra.mxu0 %v247
    %v266 = vpop.f32.mrf.mxu0
    %v267 = vadd.f32 0.0, %v266
    %268 = vdwg.mxu0
    %v270 = vrot.slane %v267, 1
    %v271 = vsel %vm193, %v267, 0
    %v274 = vsel %vm193, %v164, 0
    %276 = vmatpush.xpose.msra.mxu0 0.0
    %277 = vmatpush.xpose.msra.mxu0 0.0
    %278 = vmatpush.xpose.msra.mxu0 0.0
    %279 = vmatpush.xpose.msra.mxu0 0.0
    %280 = vmatpush.xpose.msra.mxu0 0.0
    %281 = vmatpush.xpose.msra.mxu0 0.0
    %282 = vmatpush.xpose.msra.mxu0 0.0
    %283 = vmatpush.xpose.msra.mxu0 0.0
    %284 = vmatpush.xpose.msra.mxu0 0.0
    %285 = vmatpush.xpose.msra.mxu0 0.0
    %286 = vmatpush.xpose.msra.mxu0 0.0
    %287 = vmatpush.xpose.msra.mxu0 0.0
    %288 = vmatpush.xpose.msra.mxu0 0.0
    %289 = vmatpush.xpose.msra.mxu0 0.0
    %290 = vmatpush.xpose.msra.mxu0 0.0
    %291 = vmatpush.xpose.msra.mxu0 %v274
    %292 = vmatmul.f32.gmra.mxu0 %v271
    %v293 = vpop.f32.mrf.mxu0
    %v294 = vadd.f32 0.0, %v293
    %295 = vdwg.mxu0
    %v296 = vsel %vm193, %v270, 0
    %v299 = vsel %vm193, %v165, 0
    %301 = vmatpush.xpose.msra.mxu0 0.0
    %302 = vmatpush.xpose.msra.mxu0 0.0
    %303 = vmatpush.xpose.msra.mxu0 0.0
    %304 = vmatpush.xpose.msra.mxu0 0.0
    %305 = vmatpush.xpose.msra.mxu0 0.0
    %306 = vmatpush.xpose.msra.mxu0 0.0
    %307 = vmatpush.xpose.msra.mxu0 0.0
    %308 = vmatpush.xpose.msra.mxu0 0.0
    %309 = vmatpush.xpose.msra.mxu0 0.0
    %310 = vmatpush.xpose.msra.mxu0 0.0
    %311 = vmatpush.xpose.msra.mxu0 0.0
    %312 = vmatpush.xpose.msra.mxu0 0.0
    %313 = vmatpush.xpose.msra.mxu0 0.0
    %314 = vmatpush.xpose.msra.mxu0 0.0
    %315 = vmatpush.xpose.msra.mxu0 0.0
    %316 = vmatpush.xpose.msra.mxu0 %v299
    %317 = vmatmul.f32.gmra.mxu0 %v296
    %v318 = vpop.f32.mrf.mxu0
    %v319 = vadd.f32 0.0, %v318
    %320 = vdwg.mxu0
    %vm321 = vcmask 57344
    %v322 = vsel %vm321, %v294, -inf
    %323 = vmax.xlane.f32.xlu0 %v322
    %v324 = vpop.xlane.xlu0 %323
    %v325 = vsel %vm321, %v319, -inf
    %326 = vmax.xlane.f32.xlu0 %v325
    %v327 = vpop.xlane.xlu0 %326
    %v328 = vsub.f32 %v294, %v324
    %v329 = vsub.f32 %v319, %v327
    %v330 = vmul.f32 %v328, 1.442695
    %v331 = vpow.pop %v330
    %v332 = vmul.f32 %v329, 1.442695
    %v333 = vpow.pop %v332
    %v334 = vsel %vm321, %v331, 0.0
    %335 = vadd.xlane.f32.xlu0 %v334
    %v336 = vpop.xlane.xlu0 %335
    %v337 = vsel %vm321, %v333, 0.0
    %338 = vadd.xlane.f32.xlu0 %v337
    %v339 = vpop.xlane.xlu0 %338
    %v340 = vrcp.pop %v336
    %v341 = vrcp.pop %v339
    %v342 = vmul.f32 %v336, %v340
    %v343 = vmul.f32 %v339, %v341
    %v344 = vsub.f32 2.0, %v342
    %v345 = vsub.f32 2.0, %v343
    %v346 = vmul.f32 %v340, %v344
    %v347 = vmul.f32 %v341, %v345
    %v348 = vmul.f32 %v331, %v346
    %v349 = vmul.f32 %v333, %v347
    %vm350 = vcmask 64512
    %v352 = vsel %vm350, %v348, 0
    %354 = vmatpush.msra.mxu0 0.0
    %355 = vmatpush.msra.mxu0 0.0
    %356 = vmatpush.msra.mxu0 0.0
    %357 = vmatpush.msra.mxu0 0.0
    %358 = vmatpush.msra.mxu0 0.0
    %359 = vmatpush.msra.mxu0 0.0
    %360 = vmatpush.msra.mxu0 0.0
    %361 = vmatpush.msra.mxu0 0.0
    %362 = vmatpush.msra.mxu0 0.0
    %363 = vmatpush.msra.mxu0 0.0
    %364 = vmatpush.msra.mxu0 0.0
    %365 = vmatpush.msra.mxu0 0.0
    %366 = vmatpush.msra.mxu0 0.0
    %367 = vmatpush.msra.mxu0 0.0
    %368 = vmatpush.msra.mxu0 0.0
    %369 = vmatpush.msra.mxu0 %v164
    %370 = vmatmul.f32.gmra.mxu0 %v352
    %v371 = vpop.f32.mrf.mxu0
    %v372 = vadd.f32 0.0, %v371
    %373 = vdwg.mxu0
    %v375 = vsel %vm350, %v349, 0
    %377 = vmatpush.msra.mxu0 0.0
    %378 = vmatpush.msra.mxu0 0.0
    %379 = vmatpush.msra.mxu0 0.0
    %380 = vmatpush.msra.mxu0 0.0
    %381 = vmatpush.msra.mxu0 0.0
    %382 = vmatpush.msra.mxu0 0.0
    %383 = vmatpush.msra.mxu0 0.0
    %384 = vmatpush.msra.mxu0 0.0
    %385 = vmatpush.msra.mxu0 0.0
    %386 = vmatpush.msra.mxu0 0.0
    %387 = vmatpush.msra.mxu0 0.0
    %388 = vmatpush.msra.mxu0 0.0
    %389 = vmatpush.msra.mxu0 0.0
    %390 = vmatpush.msra.mxu0 0.0
    %391 = vmatpush.msra.mxu0 0.0
    %392 = vmatpush.msra.mxu0 %v165
    %393 = vmatmul.f32.gmra.mxu0 %v375
    %v394 = vpop.f32.mrf.mxu0
    %v395 = vadd.f32 0.0, %v394
    %396 = vdwg.mxu0
    %397 = vmatpush.msra.mxu0 0.0
    %398 = vmatpush.msra.mxu0 0.0
    %399 = vmatpush.msra.mxu0 0.0
    %400 = vmatpush.msra.mxu0 0.0
    %401 = vmatpush.msra.mxu0 0.0
    %402 = vmatpush.msra.mxu0 0.0
    %403 = vmatpush.msra.mxu0 0.0
    %404 = vmatpush.msra.mxu0 0.0
    %405 = vmatpush.msra.mxu0 0.0
    %406 = vmatpush.msra.mxu0 0.0
    %407 = vmatpush.msra.mxu0 0.0
    %408 = vmatpush.msra.mxu0 0.0
    %409 = vmatpush.msra.mxu0 0.0
    %410 = vmatpush.msra.mxu0 0.0
    %411 = vmatpush.msra.mxu0 0.0
    %412 = vmatpush.msra.mxu0 %v166
    %413 = vmatmul.f32.gmra.mxu0 %v352
    %v414 = vpop.f32.mrf.mxu0
    %v415 = vadd.f32 0.0, %v414
    %416 = vdwg.mxu0
    %417 = vmatpush.msra.mxu0 0.0
    %418 = vmatpush.msra.mxu0 0.0
    %419 = vmatpush.msra.mxu0 0.0
    %420 = vmatpush.msra.mxu0 0.0
    %421 = vmatpush.msra.mxu0 0.0
    %422 = vmatpush.msra.mxu0 0.0
    %423 = vmatpush.msra.mxu0 0.0
    %424 = vmatpush.msra.mxu0 0.0
    %425 = vmatpush.msra.mxu0 0.0
    %426 = vmatpush.msra.mxu0 0.0
    %427 = vmatpush.msra.mxu0 0.0
    %428 = vmatpush.msra.mxu0 0.0
    %429 = vmatpush.msra.mxu0 0.0
    %430 = vmatpush.msra.mxu0 0.0
    %431 = vmatpush.msra.mxu0 0.0
    %432 = vmatpush.msra.mxu0 %v167
    %433 = vmatmul.f32.gmra.mxu0 %v375
    %v434 = vpop.f32.mrf.mxu0
    %v435 = vadd.f32 0.0, %v434
    %436 = vdwg.mxu0
    %v439 = vrot.slane %v435, 7
    %vm440 = vcmask 1041409
    %v441 = vsel %vm440, %v439, %v415
    %v442 = vsel %vm193, %v441, 0
    %444 = vmatpush.msra.mxu0 0.0
    %445 = vmatpush.msra.mxu0 0.0
    %446 = vmatpush.msra.mxu0 0.0
    %447 = vmatpush.msra.mxu0 0.0
    %448 = vmatpush.msra.mxu0 0.0
    %449 = vmatpush.msra.mxu0 0.0
    %450 = vmatpush.msra.mxu0 0.0
    %451 = vmatpush.msra.mxu0 0.0
    %452 = vmatpush.msra.mxu0 0.0
    %453 = vmatpush.msra.mxu0 0.0
    %454 = vmatpush.msra.mxu0 0.0
    %455 = vmatpush.msra.mxu0 0.0
    %456 = vmatpush.msra.mxu0 %v184
    %457 = vmatpush.msra.mxu0 %v183
    %458 = vmatpush.msra.mxu0 %v182
    %459 = vmatpush.msra.mxu0 %v181
    %460 = vmatmul.f32.gmra.mxu0 %v442
    %v461 = vpop.f32.mrf.mxu0
    %v462 = vadd.f32 0.0, %v461
    %463 = vdwg.mxu0
    %v466 = vrot.slane %v395, 7
    %v467 = vsel %vm440, %v466, %v372
    %v468 = vsel %vm193, %v467, 0
    %470 = vmatpush.msra.mxu0 0.0
    %471 = vmatpush.msra.mxu0 0.0
    %472 = vmatpush.msra.mxu0 0.0
    %473 = vmatpush.msra.mxu0 0.0
    %474 = vmatpush.msra.mxu0 0.0
    %475 = vmatpush.msra.mxu0 0.0
    %476 = vmatpush.msra.mxu0 0.0
    %477 = vmatpush.msra.mxu0 0.0
    %478 = vmatpush.msra.mxu0 0.0
    %479 = vmatpush.msra.mxu0 0.0
    %480 = vmatpush.msra.mxu0 0.0
    %481 = vmatpush.msra.mxu0 0.0
    %482 = vmatpush.msra.mxu0 %v179
    %483 = vmatpush.msra.mxu0 %v178
    %484 = vmatpush.msra.mxu0 %v177
    %485 = vmatpush.msra.mxu0 %v176
    %486 = vmatmul.f32.gmra.mxu0 %v468
    %v487 = vpop.f32.mrf.mxu0
    %v488 = vadd.f32 %v462, %v487
    %489 = vdwg.mxu0
    %490 = vmatpush.msra.mxu0 0.0
    %491 = vmatpush.msra.mxu0 0.0
    %492 = vmatpush.msra.mxu0 0.0
    %493 = vmatpush.msra.mxu0 0.0
    %494 = vmatpush.msra.mxu0 0.0
    %495 = vmatpush.msra.mxu0 0.0
    %496 = vmatpush.msra.mxu0 0.0
    %497 = vmatpush.msra.mxu0 0.0
    %498 = vmatpush.msra.mxu0 0.0
    %499 = vmatpush.msra.mxu0 0.0
    %500 = vmatpush.msra.mxu0 0.0
    %501 = vmatpush.msra.mxu0 0.0
    %502 = vmatpush.msra.mxu0 %v189
    %503 = vmatpush.msra.mxu0 %v188
    %504 = vmatpush.msra.mxu0 %v187
    %505 = vmatpush.msra.mxu0 %v186
    %506 = vmatmul.f32.gmra.mxu0 %v247
    %v507 = vpop.f32.mrf.mxu0
    %v508 = vadd.f32 0.0, %v507
    %509 = vdwg.mxu0
    %v510 = vadd.f32 %v488, %v508
    %v511 = vtanh.pop %v510
    %vm512 = vcmask 254976
    %513 = vst.msk [vmem:[#allocation18] sm:$0x3] %vm512, %v511
    %s514 = scalar_lea.vmem [#allocation4], 2
    %v515 = vld [vmem:[%s514] sm:$0x3]
    %v517 = vsel %vm193, %v511, 0
    %519 = vmatpush.msra.mxu0 0.0
    %520 = vmatpush.msra.mxu0 0.0
    %521 = vmatpush.msra.mxu0 0.0
    %522 = vmatpush.msra.mxu0 0.0
    %523 = vmatpush.msra.mxu0 0.0
    %524 = vmatpush.msra.mxu0 0.0
    %525 = vmatpush.msra.mxu0 0.0
    %526 = vmatpush.msra.mxu0 0.0
    %527 = vmatpush.msra.mxu0 0.0
    %528 = vmatpush.msra.mxu0 0.0
    %529 = vmatpush.msra.mxu0 0.0
    %530 = vmatpush.msra.mxu0 0.0
    %531 = vmatpush.msra.mxu0 %v171
    %532 = vmatpush.msra.mxu0 %v170
    %533 = vmatpush.msra.mxu0 %v169
    %534 = vmatpush.msra.mxu0 %v168
    %535 = vmatmul.f32.gmra.mxu0 %v517
    %v536 = vpop.f32.mrf.mxu0
    %v537 = vadd.f32 0.0, %v536
    %538 = vdwg.mxu0
    %v539 = vadd.f32 %v515, %v537
    %v540 = vmul.f32 %v539, 0.5
    %v541 = vtanh.pop %v540
    %v542 = vadd.f32 %v541, 1.0
    %v543 = vmul.f32 %v542, 0.5
    %v544 = vtanh.pop %v539
    %v545 = vmul.f32 %v543, %v237
    %547 = vrot.lane.b32.xlu0 %v544, 64
    %v548 = vpop.permute.xlu0 %547
    %v550 = vmul.f32 %v543, %v548
    %552 = vrot.lane.b32.xlu0 %v550, 32
    %v553 = vpop.permute.xlu0 %552
    %v555 = vadd.f32 %v545, %v553
    %v556 = vtanh.pop %v555
    %558 = vrot.lane.b32.xlu0 %v556, 64
    %v559 = vpop.permute.xlu0 %558
    %v561 = vmul.f32 %v543, %v559
    %563 = vrot.lane.b32.xlu0 %v561, 32
    %v564 = vpop.permute.xlu0 %563
    %v565 = vsel %vm193, %v564, 0
    %567 = vmatpush.msra.mxu0 0.0
    %568 = vmatpush.msra.mxu0 0.0
    %569 = vmatpush.msra.mxu0 0.0
    %570 = vmatpush.msra.mxu0 0.0
    %571 = vmatpush.msra.mxu0 0.0
    %572 = vmatpush.msra.mxu0 0.0
    %573 = vmatpush.msra.mxu0 0.0
    %574 = vmatpush.msra.mxu0 0.0
    %575 = vmatpush.msra.mxu0 0.0
    %576 = vmatpush.msra.mxu0 0.0
    %577 = vmatpush.msra.mxu0 0.0
    %578 = vmatpush.msra.mxu0 0.0
    %579 = vmatpush.msra.mxu0 %v175
    %580 = vmatpush.msra.mxu0 %v174
    %581 = vmatpush.msra.mxu0 %v173
    %582 = vmatpush.msra.mxu0 %v172
    %583 = vmatmul.f32.gmra.mxu0 %v565
    %v584 = vpop.f32.mrf.mxu0
    %v585 = vadd.f32 0.0, %v584
    %586 = vdwg.mxu0
    %v588 = vrot.slane %v585, 1
    %v589 = vsel %vm193, %v585, 0
    %591 = vmatpush.xpose.msra.mxu0 0.0
    %592 = vmatpush.xpose.msra.mxu0 0.0
    %593 = vmatpush.xpose.msra.mxu0 0.0
    %594 = vmatpush.xpose.msra.mxu0 0.0
    %595 = vmatpush.xpose.msra.mxu0 0.0
    %596 = vmatpush.xpose.msra.mxu0 0.0
    %597 = vmatpush.xpose.msra.mxu0 0.0
    %598 = vmatpush.xpose.msra.mxu0 0.0
    %599 = vmatpush.xpose.msra.mxu0 0.0
    %600 = vmatpush.xpose.msra.mxu0 0.0
    %601 = vmatpush.xpose.msra.mxu0 0.0
    %602 = vmatpush.xpose.msra.mxu0 0.0
    %603 = vmatpush.xpose.msra.mxu0 0.0
    %604 = vmatpush.xpose.msra.mxu0 0.0
    %605 = vmatpush.xpose.msra.mxu0 0.0
    %606 = vmatpush.xpose.msra.mxu0 %v274
    %607 = vmatmul.f32.gmra.mxu0 %v589
    %v608 = vpop.f32.mrf.mxu0
    %v609 = vadd.f32 0.0, %v608
    %610 = vdwg.mxu0
    %v611 = vsel %vm193, %v588, 0
    %613 = vmatpush.xpose.msra.mxu0 0.0
    %614 = vmatpush.xpose.msra.mxu0 0.0
    %615 = vmatpush.xpose.msra.mxu0 0.0
    %616 = vmatpush.xpose.msra.mxu0 0.0
    %617 = vmatpush.xpose.msra.mxu0 0.0
    %618 = vmatpush.xpose.msra.mxu0 0.0
    %619 = vmatpush.xpose.msra.mxu0 0.0
    %620 = vmatpush.xpose.msra.mxu0 0.0
    %621 = vmatpush.xpose.msra.mxu0 0.0
    %622 = vmatpush.xpose.msra.mxu0 0.0
    %623 = vmatpush.xpose.msra.mxu0 0.0
    %624 = vmatpush.xpose.msra.mxu0 0.0
    %625 = vmatpush.xpose.msra.mxu0 0.0
    %626 = vmatpush.xpose.msra.mxu0 0.0
    %627 = vmatpush.xpose.msra.mxu0 0.0
    %628 = vmatpush.xpose.msra.mxu0 %v299
    %629 = vmatmul.f32.gmra.mxu0 %v611
    %v630 = vpop.f32.mrf.mxu0
    %v631 = vadd.f32 0.0, %v630
    %632 = vdwg.mxu0
    %v633 = vsel %vm321, %v609, -inf
    %634 = vmax.xlane.f32.xlu0 %v633
    %v635 = vpop.xlane.xlu0 %634
    %v636 = vsel %vm321, %v631, -inf
    %637 = vmax.xlane.f32.xlu0 %v636
    %v638 = vpop.xlane.xlu0 %637
    %v639 = vsub.f32 %v609, %v635
    %v640 = vsub.f32 %v631, %v638
    %v641 = vmul.f32 %v639, 1.442695
    %v642 = vpow.pop %v641
    %v643 = vmul.f32 %v640, 1.442695
    %v644 = vpow.pop %v643
    %v645 = vsel %vm321, %v642, 0.0
    %646 = vadd.xlane.f32.xlu0 %v645
    %v647 = vpop.xlane.xlu0 %646
    %v648 = vsel %vm321, %v644, 0.0
    %649 = vadd.xlane.f32.xlu0 %v648
    %v650 = vpop.xlane.xlu0 %649
    %v651 = vrcp.pop %v647
    %v652 = vrcp.pop %v650
    %v653 = vmul.f32 %v647, %v651
    %v654 = vmul.f32 %v650, %v652
    %v655 = vsub.f32 2.0, %v653
    %v656 = vsub.f32 2.0, %v654
    %v657 = vmul.f32 %v651, %v655
    %v658 = vmul.f32 %v652, %v656
    %v659 = vmul.f32 %v642, %v657
    %v660 = vmul.f32 %v644, %v658
    %v662 = vsel %vm350, %v659, 0
    %664 = vmatpush.msra.mxu0 0.0
    %665 = vmatpush.msra.mxu0 0.0
    %666 = vmatpush.msra.mxu0 0.0
    %667 = vmatpush.msra.mxu0 0.0
    %668 = vmatpush.msra.mxu0 0.0
    %669 = vmatpush.msra.mxu0 0.0
    %670 = vmatpush.msra.mxu0 0.0
    %671 = vmatpush.msra.mxu0 0.0
    %672 = vmatpush.msra.mxu0 0.0
    %673 = vmatpush.msra.mxu0 0.0
    %674 = vmatpush.msra.mxu0 0.0
    %675 = vmatpush.msra.mxu0 0.0
    %676 = vmatpush.msra.mxu0 0.0
    %677 = vmatpush.msra.mxu0 0.0
    %678 = vmatpush.msra.mxu0 0.0
    %679 = vmatpush.msra.mxu0 %v164
    %680 = vmatmul.f32.gmra.mxu0 %v662
    %v681 = vpop.f32.mrf.mxu0
    %v682 = vadd.f32 0.0, %v681
    %683 = vdwg.mxu0
    %v685 = vsel %vm350, %v660, 0
    %687 = vmatpush.msra.mxu0 0.0
    %688 = vmatpush.msra.mxu0 0.0
    %689 = vmatpush.msra.mxu0 0.0
    %690 = vmatpush.msra.mxu0 0.0
    %691 = vmatpush.msra.mxu0 0.0
    %692 = vmatpush.msra.mxu0 0.0
    %693 = vmatpush.msra.mxu0 0.0
    %694 = vmatpush.msra.mxu0 0.0
    %695 = vmatpush.msra.mxu0 0.0
    %696 = vmatpush.msra.mxu0 0.0
    %697 = vmatpush.msra.mxu0 0.0
    %698 = vmatpush.msra.mxu0 0.0
    %699 = vmatpush.msra.mxu0 0.0
    %700 = vmatpush.msra.mxu0 0.0
    %701 = vmatpush.msra.mxu0 0.0
    %702 = vmatpush.msra.mxu0 %v165
    %703 = vmatmul.f32.gmra.mxu0 %v685
    %v704 = vpop.f32.mrf.mxu0
    %v705 = vadd.f32 0.0, %v704
    %706 = vdwg.mxu0
    %707 = vmatpush.msra.mxu0 0.0
    %708 = vmatpush.msra.mxu0 0.0
    %709 = vmatpush.msra.mxu0 0.0
    %710 = vmatpush.msra.mxu0 0.0
    %711 = vmatpush.msra.mxu0 0.0
    %712 = vmatpush.msra.mxu0 0.0
    %713 = vmatpush.msra.mxu0 0.0
    %714 = vmatpush.msra.mxu0 0.0
    %715 = vmatpush.msra.mxu0 0.0
    %716 = vmatpush.msra.mxu0 0.0
    %717 = vmatpush.msra.mxu0 0.0
    %718 = vmatpush.msra.mxu0 0.0
    %719 = vmatpush.msra.mxu0 0.0
    %720 = vmatpush.msra.mxu0 0.0
    %721 = vmatpush.msra.mxu0 0.0
    %722 = vmatpush.msra.mxu0 %v166
    %723 = vmatmul.f32.gmra.mxu0 %v662
    %v724 = vpop.f32.mrf.mxu0
    %v725 = vadd.f32 0.0, %v724
    %726 = vdwg.mxu0
    %727 = vmatpush.msra.mxu0 0.0
    %728 = vmatpush.msra.mxu0 0.0
    %729 = vmatpush.msra.mxu0 0.0
    %730 = vmatpush.msra.mxu0 0.0
    %731 = vmatpush.msra.mxu0 0.0
    %732 = vmatpush.msra.mxu0 0.0
    %733 = vmatpush.msra.mxu0 0.0
    %734 = vmatpush.msra.mxu0 0.0
    %735 = vmatpush.msra.mxu0 0.0
    %736 = vmatpush.msra.mxu0 0.0
    %737 = vmatpush.msra.mxu0 0.0
    %738 = vmatpush.msra.mxu0 0.0
    %739 = vmatpush.msra.mxu0 0.0
    %740 = vmatpush.msra.mxu0 0.0
    %741 = vmatpush.msra.mxu0 0.0
    %742 = vmatpush.msra.mxu0 %v167
    %743 = vmatmul.f32.gmra.mxu0 %v685
    %v744 = vpop.f32.mrf.mxu0
    %v745 = vadd.f32 0.0, %v744
    %746 = vdwg.mxu0
    %v749 = vrot.slane %v745, 7
    %v750 = vsel %vm440, %v749, %v725
    %v751 = vsel %vm193, %v750, 0
    %753 = vmatpush.msra.mxu0 0.0
    %754 = vmatpush.msra.mxu0 0.0
    %755 = vmatpush.msra.mxu0 0.0
    %756 = vmatpush.msra.mxu0 0.0
    %757 = vmatpush.msra.mxu0 0.0
    %758 = vmatpush.msra.mxu0 0.0
    %759 = vmatpush.msra.mxu0 0.0
    %760 = vmatpush.msra.mxu0 0.0
    %761 = vmatpush.msra.mxu0 0.0
    %762 = vmatpush.msra.mxu0 0.0
    %763 = vmatpush.msra.mxu0 0.0
    %764 = vmatpush.msra.mxu0 0.0
    %765 = vmatpush.msra.mxu0 %v184
    %766 = vmatpush.msra.mxu0 %v183
    %767 = vmatpush.msra.mxu0 %v182
    %768 = vmatpush.msra.mxu0 %v181
    %769 = vmatmul.f32.gmra.mxu0 %v751
    %v770 = vpop.f32.mrf.mxu0
    %v771 = vadd.f32 0.0, %v770
    %772 = vdwg.mxu0
    %v775 = vrot.slane %v705, 7
    %v776 = vsel %vm440, %v775, %v682
    %v777 = vsel %vm193, %v776, 0
    %779 = vmatpush.msra.mxu0 0.0
    %780 = vmatpush.msra.mxu0 0.0
    %781 = vmatpush.msra.mxu0 0.0
    %782 = vmatpush.msra.mxu0 0.0
    %783 = vmatpush.msra.mxu0 0.0
    %784 = vmatpush.msra.mxu0 0.0
    %785 = vmatpush.msra.mxu0 0.0
    %786 = vmatpush.msra.mxu0 0.0
    %787 = vmatpush.msra.mxu0 0.0
    %788 = vmatpush.msra.mxu0 0.0
    %789 = vmatpush.msra.mxu0 0.0
    %790 = vmatpush.msra.mxu0 0.0
    %791 = vmatpush.msra.mxu0 %v179
    %792 = vmatpush.msra.mxu0 %v178
    %793 = vmatpush.msra.mxu0 %v177
    %794 = vmatpush.msra.mxu0 %v176
    %795 = vmatmul.f32.gmra.mxu0 %v777
    %v796 = vpop.f32.mrf.mxu0
    %v797 = vadd.f32 %v771, %v796
    %798 = vdwg.mxu0
    %799 = vmatpush.msra.mxu0 0.0
    %800 = vmatpush.msra.mxu0 0.0
    %801 = vmatpush.msra.mxu0 0.0
    %802 = vmatpush.msra.mxu0 0.0
    %803 = vmatpush.msra.mxu0 0.0
    %804 = vmatpush.msra.mxu0 0.0
    %805 = vmatpush.msra.mxu0 0.0
    %806 = vmatpush.msra.mxu0 0.0
    %807 = vmatpush.msra.mxu0 0.0
    %808 = vmatpush.msra.mxu0 0.0
    %809 = vmatpush.msra.mxu0 0.0
    %810 = vmatpush.msra.mxu0 0.0
    %811 = vmatpush.msra.mxu0 %v189
    %812 = vmatpush.msra.mxu0 %v188
    %813 = vmatpush.msra.mxu0 %v187
    %814 = vmatpush.msra.mxu0 %v186
    %815 = vmatmul.f32.gmra.mxu0 %v565
    %v816 = vpop.f32.mrf.mxu0
    %v817 = vadd.f32 0.0, %v816
    %818 = vdwg.mxu0
    %v819 = vadd.f32 %v797, %v817
    %v820 = vtanh.pop %v819
    %s821 = scalar_lea.vmem [#allocation18], 2
    %822 = vst.msk [vmem:[%s821] sm:$0x3] %vm512, %v820
    %s823 = scalar_lea.vmem [#allocation4], 4
    %v824 = vld [vmem:[%s823] sm:$0x3]
    %v826 = vsel %vm193, %v820, 0
    %828 = vmatpush.msra.mxu0 0.0
    %829 = vmatpush.msra.mxu0 0.0
    %830 = vmatpush.msra.mxu0 0.0
    %831 = vmatpush.msra.mxu0 0.0
    %832 = vmatpush.msra.mxu0 0.0
    %833 = vmatpush.msra.mxu0 0.0
    %834 = vmatpush.msra.mxu0 0.0
    %835 = vmatpush.msra.mxu0 0.0
    %836 = vmatpush.msra.mxu0 0.0
    %837 = vmatpush.msra.mxu0 0.0
    %838 = vmatpush.msra.mxu0 0.0
    %839 = vmatpush.msra.mxu0 0.0
    %840 = vmatpush.msra.mxu0 %v171
    %841 = vmatpush.msra.mxu0 %v170
    %842 = vmatpush.msra.mxu0 %v169
    %843 = vmatpush.msra.mxu0 %v168
    %844 = vmatmul.f32.gmra.mxu0 %v826
    %v845 = vpop.f32.mrf.mxu0
    %v846 = vadd.f32 0.0, %v845
    %847 = vdwg.mxu0
    %v848 = vadd.f32 %v824, %v846
    %v849 = vmul.f32 %v848, 0.5
    %v850 = vtanh.pop %v849
    %v851 = vadd.f32 %v850, 1.0
    %v852 = vmul.f32 %v851, 0.5
    %v853 = vtanh.pop %v848
    %v854 = vmul.f32 %v852, %v555
    %856 = vrot.lane.b32.xlu0 %v853, 64
    %v857 = vpop.permute.xlu0 %856
    %v859 = vmul.f32 %v852, %v857
    %861 = vrot.lane.b32.xlu0 %v859, 32
    %v862 = vpop.permute.xlu0 %861
    %v864 = vadd.f32 %v854, %v862
    %v865 = vtanh.pop %v864
    %867 = vrot.lane.b32.xlu0 %v865, 64
    %v868 = vpop.permute.xlu0 %867
    %v870 = vmul.f32 %v852, %v868
    %872 = vrot.lane.b32.xlu0 %v870, 32
    %v873 = vpop.permute.xlu0 %872
    %v874 = vsel %vm193, %v873, 0
    %876 = vmatpush.msra.mxu0 0.0
    %877 = vmatpush.msra.mxu0 0.0
    %878 = vmatpush.msra.mxu0 0.0
    %879 = vmatpush.msra.mxu0 0.0
    %880 = vmatpush.msra.mxu0 0.0
    %881 = vmatpush.msra.mxu0 0.0
    %882 = vmatpush.msra.mxu0 0.0
    %883 = vmatpush.msra.mxu0 0.0
    %884 = vmatpush.msra.mxu0 0.0
    %885 = vmatpush.msra.mxu0 0.0
    %886 = vmatpush.msra.mxu0 0.0
    %887 = vmatpush.msra.mxu0 0.0
    %888 = vmatpush.msra.mxu0 %v175
    %889 = vmatpush.msra.mxu0 %v174
    %890 = vmatpush.msra.mxu0 %v173
    %891 = vmatpush.msra.mxu0 %v172
    %892 = vmatmul.f32.gmra.mxu0 %v874
    %v893 = vpop.f32.mrf.mxu0
    %v894 = vadd.f32 0.0, %v893
    %895 = vdwg.mxu0
    %v897 = vrot.slane %v894, 1
    %v898 = vsel %vm193, %v894, 0
    %900 = vmatpush.xpose.msra.mxu0 0.0
    %901 = vmatpush.xpose.msra.mxu0 0.0
    %902 = vmatpush.xpose.msra.mxu0 0.0
    %903 = vmatpush.xpose.msra.mxu0 0.0
    %904 = vmatpush.xpose.msra.mxu0 0.0
    %905 = vmatpush.xpose.msra.mxu0 0.0
    %906 = vmatpush.xpose.msra.mxu0 0.0
    %907 = vmatpush.xpose.msra.mxu0 0.0
    %908 = vmatpush.xpose.msra.mxu0 0.0
    %909 = vmatpush.xpose.msra.mxu0 0.0
    %910 = vmatpush.xpose.msra.mxu0 0.0
    %911 = vmatpush.xpose.msra.mxu0 0.0
    %912 = vmatpush.xpose.msra.mxu0 0.0
    %913 = vmatpush.xpose.msra.mxu0 0.0
    %914 = vmatpush.xpose.msra.mxu0 0.0
    %915 = vmatpush.xpose.msra.mxu0 %v274
    %916 = vmatmul.f32.gmra.mxu0 %v898
    %v917 = vpop.f32.mrf.mxu0
    %v918 = vadd.f32 0.0, %v917
    %919 = vdwg.mxu0
    %v920 = vsel %vm193, %v897, 0
    %922 = vmatpush.xpose.msra.mxu0 0.0
    %923 = vmatpush.xpose.msra.mxu0 0.0
    %924 = vmatpush.xpose.msra.mxu0 0.0
    %925 = vmatpush.xpose.msra.mxu0 0.0
    %926 = vmatpush.xpose.msra.mxu0 0.0
    %927 = vmatpush.xpose.msra.mxu0 0.0
    %928 = vmatpush.xpose.msra.mxu0 0.0
    %929 = vmatpush.xpose.msra.mxu0 0.0
    %930 = vmatpush.xpose.msra.mxu0 0.0
    %931 = vmatpush.xpose.msra.mxu0 0.0
    %932 = vmatpush.xpose.msra.mxu0 0.0
    %933 = vmatpush.xpose.msra.mxu0 0.0
    %934 = vmatpush.xpose.msra.mxu0 0.0
    %935 = vmatpush.xpose.msra.mxu0 0.0
    %936 = vmatpush.xpose.msra.mxu0 0.0
    %937 = vmatpush.xpose.msra.mxu0 %v299
    %938 = vmatmul.f32.gmra.mxu0 %v920
    %v939 = vpop.f32.mrf.mxu0
    %v940 = vadd.f32 0.0, %v939
    %941 = vdwg.mxu0
    %v942 = vsel %vm321, %v918, -inf
    %943 = vmax.xlane.f32.xlu0 %v942
    %v944 = vpop.xlane.xlu0 %943
    %v945 = vsel %vm321, %v940, -inf
    %946 = vmax.xlane.f32.xlu0 %v945
    %v947 = vpop.xlane.xlu0 %946
    %v948 = vsub.f32 %v918, %v944
    %v949 = vsub.f32 %v940, %v947
    %v950 = vmul.f32 %v948, 1.442695
    %v951 = vpow.pop %v950
    %v952 = vmul.f32 %v949, 1.442695
    %v953 = vpow.pop %v952
    %v954 = vsel %vm321, %v951, 0.0
    %955 = vadd.xlane.f32.xlu0 %v954
    %v956 = vpop.xlane.xlu0 %955
    %v957 = vsel %vm321, %v953, 0.0
    %958 = vadd.xlane.f32.xlu0 %v957
    %v959 = vpop.xlane.xlu0 %958
    %v960 = vrcp.pop %v956
    %v961 = vrcp.pop %v959
    %v962 = vmul.f32 %v956, %v960
    %v963 = vmul.f32 %v959, %v961
    %v964 = vsub.f32 2.0, %v962
    %v965 = vsub.f32 2.0, %v963
    %v966 = vmul.f32 %v960, %v964
    %v967 = vmul.f32 %v961, %v965
    %v968 = vmul.f32 %v951, %v966
    %v969 = vmul.f32 %v953, %v967
    %v971 = vsel %vm350, %v968, 0
    %973 = vmatpush.msra.mxu0 0.0
    %974 = vmatpush.msra.mxu0 0.0
    %975 = vmatpush.msra.mxu0 0.0
    %976 = vmatpush.msra.mxu0 0.0
    %977 = vmatpush.msra.mxu0 0.0
    %978 = vmatpush.msra.mxu0 0.0
    %979 = vmatpush.msra.mxu0 0.0
    %980 = vmatpush.msra.mxu0 0.0
    %981 = vmatpush.msra.mxu0 0.0
    %982 = vmatpush.msra.mxu0 0.0
    %983 = vmatpush.msra.mxu0 0.0
    %984 = vmatpush.msra.mxu0 0.0
    %985 = vmatpush.msra.mxu0 0.0
    %986 = vmatpush.msra.mxu0 0.0
    %987 = vmatpush.msra.mxu0 0.0
    %988 = vmatpush.msra.mxu0 %v164
    %989 = vmatmul.f32.gmra.mxu0 %v971
    %v990 = vpop.f32.mrf.mxu0
    %v991 = vadd.f32 0.0, %v990
    %992 = vdwg.mxu0
    %v994 = vsel %vm350, %v969, 0
    %996 = vmatpush.msra.mxu0 0.0
    %997 = vmatpush.msra.mxu0 0.0
    %998 = vmatpush.msra.mxu0 0.0
    %999 = vmatpush.msra.mxu0 0.0
    %1000 = vmatpush.msra.mxu0 0.0
    %1001 = vmatpush.msra.mxu0 0.0
    %1002 = vmatpush.msra.mxu0 0.0
    %1003 = vmatpush.msra.mxu0 0.0
    %1004 = vmatpush.msra.mxu0 0.0
    %1005 = vmatpush.msra.mxu0 0.0
    %1006 = vmatpush.msra.mxu0 0.0
    %1007 = vmatpush.msra.mxu0 0.0
    %1008 = vmatpush.msra.mxu0 0.0
    %1009 = vmatpush.msra.mxu0 0.0
    %1010 = vmatpush.msra.mxu0 0.0
    %1011 = vmatpush.msra.mxu0 %v165
    %1012 = vmatmul.f32.gmra.mxu0 %v994
    %v1013 = vpop.f32.mrf.mxu0
    %v1014 = vadd.f32 0.0, %v1013
    %1015 = vdwg.mxu0
    %1016 = vmatpush.msra.mxu0 0.0
    %1017 = vmatpush.msra.mxu0 0.0
    %1018 = vmatpush.msra.mxu0 0.0
    %1019 = vmatpush.msra.mxu0 0.0
    %1020 = vmatpush.msra.mxu0 0.0
    %1021 = vmatpush.msra.mxu0 0.0
    %1022 = vmatpush.msra.mxu0 0.0
    %1023 = vmatpush.msra.mxu0 0.0
    %1024 = vmatpush.msra.mxu0 0.0
    %1025 = vmatpush.msra.mxu0 0.0
    %1026 = vmatpush.msra.mxu0 0.0
    %1027 = vmatpush.msra.mxu0 0.0
    %1028 = vmatpush.msra.mxu0 0.0
    %1029 = vmatpush.msra.mxu0 0.0
    %1030 = vmatpush.msra.mxu0 0.0
    %1031 = vmatpush.msra.mxu0 %v166
    %1032 = vmatmul.f32.gmra.mxu0 %v971
    %v1033 = vpop.f32.mrf.mxu0
    %v1034 = vadd.f32 0.0, %v1033
    %1035 = vdwg.mxu0
    %1036 = vmatpush.msra.mxu0 0.0
    %1037 = vmatpush.msra.mxu0 0.0
    %1038 = vmatpush.msra.mxu0 0.0
    %1039 = vmatpush.msra.mxu0 0.0
    %1040 = vmatpush.msra.mxu0 0.0
    %1041 = vmatpush.msra.mxu0 0.0
    %1042 = vmatpush.msra.mxu0 0.0
    %1043 = vmatpush.msra.mxu0 0.0
    %1044 = vmatpush.msra.mxu0 0.0
    %1045 = vmatpush.msra.mxu0 0.0
    %1046 = vmatpush.msra.mxu0 0.0
    %1047 = vmatpush.msra.mxu0 0.0
    %1048 = vmatpush.msra.mxu0 0.0
    %1049 = vmatpush.msra.mxu0 0.0
    %1050 = vmatpush.msra.mxu0 0.0
    %1051 = vmatpush.msra.mxu0 %v167
    %1052 = vmatmul.f32.gmra.mxu0 %v994
    %v1053 = vpop.f32.mrf.mxu0
    %v1054 = vadd.f32 0.0, %v1053
    %1055 = vdwg.mxu0
    %v1058 = vrot.slane %v1054, 7
    %v1059 = vsel %vm440, %v1058, %v1034
    %v1060 = vsel %vm193, %v1059, 0
    %1062 = vmatpush.msra.mxu0 0.0
    %1063 = vmatpush.msra.mxu0 0.0
    %1064 = vmatpush.msra.mxu0 0.0
    %1065 = vmatpush.msra.mxu0 0.0
    %1066 = vmatpush.msra.mxu0 0.0
    %1067 = vmatpush.msra.mxu0 0.0
    %1068 = vmatpush.msra.mxu0 0.0
    %1069 = vmatpush.msra.mxu0 0.0
    %1070 = vmatpush.msra.mxu0 0.0
    %1071 = vmatpush.msra.mxu0 0.0
    %1072 = vmatpush.msra.mxu0 0.0
    %1073 = vmatpush.msra.mxu0 0.0
    %1074 = vmatpush.msra.mxu0 %v184
    %1075 = vmatpush.msra.mxu0 %v183
    %1076 = vmatpush.msra.mxu0 %v182
    %1077 = vmatpush.msra.mxu0 %v181
    %1078 = vmatmul.f32.gmra.mxu0 %v1060
    %v1079 = vpop.f32.mrf.mxu0
    %v1080 = vadd.f32 0.0, %v1079
    %1081 = vdwg.mxu0
    %v1084 = vrot.slane %v1014, 7
    %v1085 = vsel %vm440, %v1084, %v991
    %v1086 = vsel %vm193, %v1085, 0
    %1088 = vmatpush.msra.mxu0 0.0
    %1089 = vmatpush.msra.mxu0 0.0
    %1090 = vmatpush.msra.mxu0 0.0
    %1091 = vmatpush.msra.mxu0 0.0
    %1092 = vmatpush.msra.mxu0 0.0
    %1093 = vmatpush.msra.mxu0 0.0
    %1094 = vmatpush.msra.mxu0 0.0
    %1095 = vmatpush.msra.mxu0 0.0
    %1096 = vmatpush.msra.mxu0 0.0
    %1097 = vmatpush.msra.mxu0 0.0
    %1098 = vmatpush.msra.mxu0 0.0
    %1099 = vmatpush.msra.mxu0 0.0
    %1100 = vmatpush.msra.mxu0 %v179
    %1101 = vmatpush.msra.mxu0 %v178
    %1102 = vmatpush.msra.mxu0 %v177
    %1103 = vmatpush.msra.mxu0 %v176
    %1104 = vmatmul.f32.gmra.mxu0 %v1086
    %v1105 = vpop.f32.mrf.mxu0
    %v1106 = vadd.f32 %v1080, %v1105
    %1107 = vdwg.mxu0
    %1108 = vmatpush.msra.mxu0 0.0
    %1109 = vmatpush.msra.mxu0 0.0
    %1110 = vmatpush.msra.mxu0 0.0
    %1111 = vmatpush.msra.mxu0 0.0
    %1112 = vmatpush.msra.mxu0 0.0
    %1113 = vmatpush.msra.mxu0 0.0
    %1114 = vmatpush.msra.mxu0 0.0
    %1115 = vmatpush.msra.mxu0 0.0
    %1116 = vmatpush.msra.mxu0 0.0
    %1117 = vmatpush.msra.mxu0 0.0
    %1118 = vmatpush.msra.mxu0 0.0
    %1119 = vmatpush.msra.mxu0 0.0
    %1120 = vmatpush.msra.mxu0 %v189
    %1121 = vmatpush.msra.mxu0 %v188
    %1122 = vmatpush.msra.mxu0 %v187
    %1123 = vmatpush.msra.mxu0 %v186
    %1124 = vmatmul.f32.gmra.mxu0 %v874
    %v1125 = vpop.f32.mrf.mxu0
    %v1126 = vadd.f32 0.0, %v1125
    %1127 = vdwg.mxu0
    %v1128 = vadd.f32 %v1106, %v1126
    %v1129 = vtanh.pop %v1128
    %s1130 = scalar_lea.vmem [#allocation18], 4
    %1131 = vst.msk [vmem:[%s1130] sm:$0x3] %vm512, %v1129
    %s1132 = scalar_lea.vmem [#allocation4], 6
    %v1133 = vld [vmem:[%s1132] sm:$0x3]
    %v1135 = vsel %vm193, %v1129, 0
    %1137 = vmatpush.msra.mxu0 0.0
    %1138 = vmatpush.msra.mxu0 0.0
    %1139 = vmatpush.msra.mxu0 0.0
    %1140 = vmatpush.msra.mxu0 0.0
    %1141 = vmatpush.msra.mxu0 0.0
    %1142 = vmatpush.msra.mxu0 0.0
    %1143 = vmatpush.msra.mxu0 0.0
    %1144 = vmatpush.msra.mxu0 0.0
    %1145 = vmatpush.msra.mxu0 0.0
    %1146 = vmatpush.msra.mxu0 0.0
    %1147 = vmatpush.msra.mxu0 0.0
    %1148 = vmatpush.msra.mxu0 0.0
    %1149 = vmatpush.msra.mxu0 %v171
    %1150 = vmatpush.msra.mxu0 %v170
    %1151 = vmatpush.msra.mxu0 %v169
    %1152 = vmatpush.msra.mxu0 %v168
    %1153 = vmatmul.f32.gmra.mxu0 %v1135
    %v1154 = vpop.f32.mrf.mxu0
    %v1155 = vadd.f32 0.0, %v1154
    %1156 = vdwg.mxu0
    %v1157 = vadd.f32 %v1133, %v1155
    %v1158 = vmul.f32 %v1157, 0.5
    %v1159 = vtanh.pop %v1158
    %v1160 = vadd.f32 %v1159, 1.0
    %v1161 = vmul.f32 %v1160, 0.5
    %v1162 = vtanh.pop %v1157
    %v1163 = vmul.f32 %v1161, %v864
    %1165 = vrot.lane.b32.xlu0 %v1162, 64
    %v1166 = vpop.permute.xlu0 %1165
    %v1168 = vmul.f32 %v1161, %v1166
    %1170 = vrot.lane.b32.xlu0 %v1168, 32
    %v1171 = vpop.permute.xlu0 %1170
    %v1173 = vadd.f32 %v1163, %v1171
    %v1174 = vtanh.pop %v1173
    %1176 = vrot.lane.b32.xlu0 %v1174, 64
    %v1177 = vpop.permute.xlu0 %1176
    %v1179 = vmul.f32 %v1161, %v1177
    %1181 = vrot.lane.b32.xlu0 %v1179, 32
    %v1182 = vpop.permute.xlu0 %1181
    %v1183 = vsel %vm193, %v1182, 0
    %1185 = vmatpush.msra.mxu0 0.0
    %1186 = vmatpush.msra.mxu0 0.0
    %1187 = vmatpush.msra.mxu0 0.0
    %1188 = vmatpush.msra.mxu0 0.0
    %1189 = vmatpush.msra.mxu0 0.0
    %1190 = vmatpush.msra.mxu0 0.0
    %1191 = vmatpush.msra.mxu0 0.0
    %1192 = vmatpush.msra.mxu0 0.0
    %1193 = vmatpush.msra.mxu0 0.0
    %1194 = vmatpush.msra.mxu0 0.0
    %1195 = vmatpush.msra.mxu0 0.0
    %1196 = vmatpush.msra.mxu0 0.0
    %1197 = vmatpush.msra.mxu0 %v175
    %1198 = vmatpush.msra.mxu0 %v174
    %1199 = vmatpush.msra.mxu0 %v173
    %1200 = vmatpush.msra.mxu0 %v172
    %1201 = vmatmul.f32.gmra.mxu0 %v1183
    %v1202 = vpop.f32.mrf.mxu0
    %v1203 = vadd.f32 0.0, %v1202
    %1204 = vdwg.mxu0
    %v1206 = vrot.slane %v1203, 1
    %v1207 = vsel %vm193, %v1203, 0
    %1209 = vmatpush.xpose.msra.mxu0 0.0
    %1210 = vmatpush.xpose.msra.mxu0 0.0
    %1211 = vmatpush.xpose.msra.mxu0 0.0
    %1212 = vmatpush.xpose.msra.mxu0 0.0
    %1213 = vmatpush.xpose.msra.mxu0 0.0
    %1214 = vmatpush.xpose.msra.mxu0 0.0
    %1215 = vmatpush.xpose.msra.mxu0 0.0
    %1216 = vmatpush.xpose.msra.mxu0 0.0
    %1217 = vmatpush.xpose.msra.mxu0 0.0
    %1218 = vmatpush.xpose.msra.mxu0 0.0
    %1219 = vmatpush.xpose.msra.mxu0 0.0
    %1220 = vmatpush.xpose.msra.mxu0 0.0
    %1221 = vmatpush.xpose.msra.mxu0 0.0
    %1222 = vmatpush.xpose.msra.mxu0 0.0
    %1223 = vmatpush.xpose.msra.mxu0 0.0
    %1224 = vmatpush.xpose.msra.mxu0 %v274
    %1225 = vmatmul.f32.gmra.mxu0 %v1207
    %v1226 = vpop.f32.mrf.mxu0
    %v1227 = vadd.f32 0.0, %v1226
    %1228 = vdwg.mxu0
    %v1229 = vsel %vm193, %v1206, 0
    %1231 = vmatpush.xpose.msra.mxu0 0.0
    %1232 = vmatpush.xpose.msra.mxu0 0.0
    %1233 = vmatpush.xpose.msra.mxu0 0.0
    %1234 = vmatpush.xpose.msra.mxu0 0.0
    %1235 = vmatpush.xpose.msra.mxu0 0.0
    %1236 = vmatpush.xpose.msra.mxu0 0.0
    %1237 = vmatpush.xpose.msra.mxu0 0.0
    %1238 = vmatpush.xpose.msra.mxu0 0.0
    %1239 = vmatpush.xpose.msra.mxu0 0.0
    %1240 = vmatpush.xpose.msra.mxu0 0.0
    %1241 = vmatpush.xpose.msra.mxu0 0.0
    %1242 = vmatpush.xpose.msra.mxu0 0.0
    %1243 = vmatpush.xpose.msra.mxu0 0.0
    %1244 = vmatpush.xpose.msra.mxu0 0.0
    %1245 = vmatpush.xpose.msra.mxu0 0.0
    %1246 = vmatpush.xpose.msra.mxu0 %v299
    %1247 = vmatmul.f32.gmra.mxu0 %v1229
    %v1248 = vpop.f32.mrf.mxu0
    %v1249 = vadd.f32 0.0, %v1248
    %1250 = vdwg.mxu0
    %v1251 = vsel %vm321, %v1227, -inf
    %1252 = vmax.xlane.f32.xlu0 %v1251
    %v1253 = vpop.xlane.xlu0 %1252
    %v1254 = vsel %vm321, %v1249, -inf
    %1255 = vmax.xlane.f32.xlu0 %v1254
    %v1256 = vpop.xlane.xlu0 %1255
    %v1257 = vsub.f32 %v1227, %v1253
    %v1258 = vsub.f32 %v1249, %v1256
    %v1259 = vmul.f32 %v1257, 1.442695
    %v1260 = vpow.pop %v1259
    %v1261 = vmul.f32 %v1258, 1.442695
    %v1262 = vpow.pop %v1261
    %v1263 = vsel %vm321, %v1260, 0.0
    %1264 = vadd.xlane.f32.xlu0 %v1263
    %v1265 = vpop.xlane.xlu0 %1264
    %v1266 = vsel %vm321, %v1262, 0.0
    %1267 = vadd.xlane.f32.xlu0 %v1266
    %v1268 = vpop.xlane.xlu0 %1267
    %v1269 = vrcp.pop %v1265
    %v1270 = vrcp.pop %v1268
    %v1271 = vmul.f32 %v1265, %v1269
    %v1272 = vmul.f32 %v1268, %v1270
    %v1273 = vsub.f32 2.0, %v1271
    %v1274 = vsub.f32 2.0, %v1272
    %v1275 = vmul.f32 %v1269, %v1273
    %v1276 = vmul.f32 %v1270, %v1274
    %v1277 = vmul.f32 %v1260, %v1275
    %v1278 = vmul.f32 %v1262, %v1276
    %v1280 = vsel %vm350, %v1277, 0
    %1282 = vmatpush.msra.mxu0 0.0
    %1283 = vmatpush.msra.mxu0 0.0
    %1284 = vmatpush.msra.mxu0 0.0
    %1285 = vmatpush.msra.mxu0 0.0
    %1286 = vmatpush.msra.mxu0 0.0
    %1287 = vmatpush.msra.mxu0 0.0
    %1288 = vmatpush.msra.mxu0 0.0
    %1289 = vmatpush.msra.mxu0 0.0
    %1290 = vmatpush.msra.mxu0 0.0
    %1291 = vmatpush.msra.mxu0 0.0
    %1292 = vmatpush.msra.mxu0 0.0
    %1293 = vmatpush.msra.mxu0 0.0
    %1294 = vmatpush.msra.mxu0 0.0
    %1295 = vmatpush.msra.mxu0 0.0
    %1296 = vmatpush.msra.mxu0 0.0
    %1297 = vmatpush.msra.mxu0 %v164
    %1298 = vmatmul.f32.gmra.mxu0 %v1280
    %v1299 = vpop.f32.mrf.mxu0
    %v1300 = vadd.f32 0.0, %v1299
    %1301 = vdwg.mxu0
    %v1303 = vsel %vm350, %v1278, 0
    %1305 = vmatpush.msra.mxu0 0.0
    %1306 = vmatpush.msra.mxu0 0.0
    %1307 = vmatpush.msra.mxu0 0.0
    %1308 = vmatpush.msra.mxu0 0.0
    %1309 = vmatpush.msra.mxu0 0.0
    %1310 = vmatpush.msra.mxu0 0.0
    %1311 = vmatpush.msra.mxu0 0.0
    %1312 = vmatpush.msra.mxu0 0.0
    %1313 = vmatpush.msra.mxu0 0.0
    %1314 = vmatpush.msra.mxu0 0.0
    %1315 = vmatpush.msra.mxu0 0.0
    %1316 = vmatpush.msra.mxu0 0.0
    %1317 = vmatpush.msra.mxu0 0.0
    %1318 = vmatpush.msra.mxu0 0.0
    %1319 = vmatpush.msra.mxu0 0.0
    %1320 = vmatpush.msra.mxu0 %v165
    %1321 = vmatmul.f32.gmra.mxu0 %v1303
    %v1322 = vpop.f32.mrf.mxu0
    %v1323 = vadd.f32 0.0, %v1322
    %1324 = vdwg.mxu0
    %1325 = vmatpush.msra.mxu0 0.0
    %1326 = vmatpush.msra.mxu0 0.0
    %1327 = vmatpush.msra.mxu0 0.0
    %1328 = vmatpush.msra.mxu0 0.0
    %1329 = vmatpush.msra.mxu0 0.0
    %1330 = vmatpush.msra.mxu0 0.0
    %1331 = vmatpush.msra.mxu0 0.0
    %1332 = vmatpush.msra.mxu0 0.0
    %1333 = vmatpush.msra.mxu0 0.0
    %1334 = vmatpush.msra.mxu0 0.0
    %1335 = vmatpush.msra.mxu0 0.0
    %1336 = vmatpush.msra.mxu0 0.0
    %1337 = vmatpush.msra.mxu0 0.0
    %1338 = vmatpush.msra.mxu0 0.0
    %1339 = vmatpush.msra.mxu0 0.0
    %1340 = vmatpush.msra.mxu0 %v166
    %1341 = vmatmul.f32.gmra.mxu0 %v1280
    %v1342 = vpop.f32.mrf.mxu0
    %v1343 = vadd.f32 0.0, %v1342
    %1344 = vdwg.mxu0
    %1345 = vmatpush.msra.mxu0 0.0
    %1346 = vmatpush.msra.mxu0 0.0
    %1347 = vmatpush.msra.mxu0 0.0
    %1348 = vmatpush.msra.mxu0 0.0
    %1349 = vmatpush.msra.mxu0 0.0
    %1350 = vmatpush.msra.mxu0 0.0
    %1351 = vmatpush.msra.mxu0 0.0
    %1352 = vmatpush.msra.mxu0 0.0
    %1353 = vmatpush.msra.mxu0 0.0
    %1354 = vmatpush.msra.mxu0 0.0
    %1355 = vmatpush.msra.mxu0 0.0
    %1356 = vmatpush.msra.mxu0 0.0
    %1357 = vmatpush.msra.mxu0 0.0
    %1358 = vmatpush.msra.mxu0 0.0
    %1359 = vmatpush.msra.mxu0 0.0
    %1360 = vmatpush.msra.mxu0 %v167
    %1361 = vmatmul.f32.gmra.mxu0 %v1303
    %v1362 = vpop.f32.mrf.mxu0
    %v1363 = vadd.f32 0.0, %v1362
    %1364 = vdwg.mxu0
    %v1367 = vrot.slane %v1363, 7
    %v1368 = vsel %vm440, %v1367, %v1343
    %v1369 = vsel %vm193, %v1368, 0
    %1371 = vmatpush.msra.mxu0 0.0
    %1372 = vmatpush.msra.mxu0 0.0
    %1373 = vmatpush.msra.mxu0 0.0
    %1374 = vmatpush.msra.mxu0 0.0
    %1375 = vmatpush.msra.mxu0 0.0
    %1376 = vmatpush.msra.mxu0 0.0
    %1377 = vmatpush.msra.mxu0 0.0
    %1378 = vmatpush.msra.mxu0 0.0
    %1379 = vmatpush.msra.mxu0 0.0
    %1380 = vmatpush.msra.mxu0 0.0
    %1381 = vmatpush.msra.mxu0 0.0
    %1382 = vmatpush.msra.mxu0 0.0
    %1383 = vmatpush.msra.mxu0 %v184
    %1384 = vmatpush.msra.mxu0 %v183
    %1385 = vmatpush.msra.mxu0 %v182
    %1386 = vmatpush.msra.mxu0 %v181
    %1387 = vmatmul.f32.gmra.mxu0 %v1369
    %v1388 = vpop.f32.mrf.mxu0
    %v1389 = vadd.f32 0.0, %v1388
    %1390 = vdwg.mxu0
    %v1393 = vrot.slane %v1323, 7
    %v1394 = vsel %vm440, %v1393, %v1300
    %v1395 = vsel %vm193, %v1394, 0
    %1397 = vmatpush.msra.mxu0 0.0
    %1398 = vmatpush.msra.mxu0 0.0
    %1399 = vmatpush.msra.mxu0 0.0
    %1400 = vmatpush.msra.mxu0 0.0
    %1401 = vmatpush.msra.mxu0 0.0
    %1402 = vmatpush.msra.mxu0 0.0
    %1403 = vmatpush.msra.mxu0 0.0
    %1404 = vmatpush.msra.mxu0 0.0
    %1405 = vmatpush.msra.mxu0 0.0
    %1406 = vmatpush.msra.mxu0 0.0
    %1407 = vmatpush.msra.mxu0 0.0
    %1408 = vmatpush.msra.mxu0 0.0
    %1409 = vmatpush.msra.mxu0 %v179
    %1410 = vmatpush.msra.mxu0 %v178
    %1411 = vmatpush.msra.mxu0 %v177
    %1412 = vmatpush.msra.mxu0 %v176
    %1413 = vmatmul.f32.gmra.mxu0 %v1395
    %v1414 = vpop.f32.mrf.mxu0
    %v1415 = vadd.f32 %v1389, %v1414
    %1416 = vdwg.mxu0
    %1417 = vmatpush.msra.mxu0 0.0
    %1418 = vmatpush.msra.mxu0 0.0
    %1419 = vmatpush.msra.mxu0 0.0
    %1420 = vmatpush.msra.mxu0 0.0
    %1421 = vmatpush.msra.mxu0 0.0
    %1422 = vmatpush.msra.mxu0 0.0
    %1423 = vmatpush.msra.mxu0 0.0
    %1424 = vmatpush.msra.mxu0 0.0
    %1425 = vmatpush.msra.mxu0 0.0
    %1426 = vmatpush.msra.mxu0 0.0
    %1427 = vmatpush.msra.mxu0 0.0
    %1428 = vmatpush.msra.mxu0 0.0
    %1429 = vmatpush.msra.mxu0 %v189
    %1430 = vmatpush.msra.mxu0 %v188
    %1431 = vmatpush.msra.mxu0 %v187
    %1432 = vmatpush.msra.mxu0 %v186
    %1433 = vmatmul.f32.gmra.mxu0 %v1183
    %v1434 = vpop.f32.mrf.mxu0
    %v1435 = vadd.f32 0.0, %v1434
    %1436 = vdwg.mxu0
    %v1437 = vadd.f32 %v1415, %v1435
    %v1438 = vtanh.pop %v1437
    %s1439 = scalar_lea.vmem [#allocation18], 6
    %1440 = vst.msk [vmem:[%s1439] sm:$0x3] %vm512, %v1438
    %1441 = vst.msk [vmem:[#allocation2] sm:$0x3] %vm512, %v1438
    %1443 = vrot.lane.b32.xlu0 %v1173, 96
    %v1444 = vpop.permute.xlu0 %1443
    %1446 = vst.msk [vmem:[#allocation3] sm:$0x3] %vm512, %v1444
    // Predicated region
    $region70: #{tpu_custom_call.1} parent=1 // pred_check
      %p1447 = pneg %p155
    $region71: #{tpu_custom_call.1} parent=1 // pred_check_branch
      %1449 = sbr.rel (%p1447) target = $region73
    $region72: #{tpu_custom_call.1} parent=1 // pred_region
      %1450 = vst.msk [vmem:[#allocation19] sm:$0x3] %vm512, %v1438
      %1451 = vst.msk [vmem:[#allocation21] sm:$0x3] %vm512, %v1444
    $region73: #{tpu_custom_call.1} parent=1 // pred_fallthru
      _
    // Predicated region
    $region74: #{tpu_custom_call.1} parent=1 // pred_check
      _
    $region75: #{tpu_custom_call.1} parent=1 // pred_check_branch
      %1453 = sbr.rel (0) target = $region77
    $region76: #{tpu_custom_call.1} parent=1 // pred_region
      %1455 = vsyncadd [#allocation6], 0
      %s1456 = sshll.u32 [#allocation18], 4
      %s1457 = int_to_ptr.vmem [resolvable:$true] %s1456
      %s1458 = sshll.u32 %s8, 4
      %s1459 = int_to_ptr.hbm [resolvable:$true] %s1458
      %1464 = dma.vmem_to_hbm [thread:$0]  %s1457, 128, %s1459, [#allocation6], 32, 32, 2
    $region77: #{tpu_custom_call.1} parent=1 // pred_fallthru
      _
    // Predicated region
    $region78: #{tpu_custom_call.1} parent=1 // pred_check
      _
    $region79: #{tpu_custom_call.1} parent=1 // pred_check_branch
      %1466 = sbr.rel (0) target = $region81
    $region80: #{tpu_custom_call.1} parent=1 // pred_region
      %1468 = vsyncadd [#allocation20], 0
      %s1470 = sshll.u32 [#allocation19], 4
      %s1471 = int_to_ptr.vmem [resolvable:$true] %s1470
      %s1472 = sshll.u32 %s9, 4
      %s1473 = int_to_ptr.hbm [resolvable:$true] %s1472
      %1475 = dma.vmem_to_hbm [thread:$0]  %s1471, 32, %s1473, [#allocation20]
    $region81: #{tpu_custom_call.1} parent=1 // pred_fallthru
      _
    // Predicated region
    $region82: #{tpu_custom_call.1} parent=1 // pred_check
      _
    $region83: #{tpu_custom_call.1} parent=1 // pred_check_branch
      %1477 = sbr.rel (0) target = $region85
    $region84: #{tpu_custom_call.1} parent=1 // pred_region
      %1479 = vsyncadd [#allocation20], 0
      %s1481 = sshll.u32 [#allocation21], 4
      %s1482 = int_to_ptr.vmem [resolvable:$true] %s1481
      %s1483 = sshll.u32 %s10, 4
      %s1484 = int_to_ptr.hbm [resolvable:$true] %s1483
      %1486 = dma.vmem_to_hbm [thread:$0]  %s1482, 32, %s1484, [#allocation20]
    $region85: #{tpu_custom_call.1} parent=1 // pred_fallthru
      _
    // Predicated region
    $region86: #{tpu_custom_call.1} parent=1 // pred_check
      _
    $region87: #{tpu_custom_call.1} parent=1 // pred_check_branch
      %1488 = sbr.rel (0) target = $region89
    $region88: #{tpu_custom_call.1} parent=1 // pred_region
      %1490 = dma.done [#allocation6], 128
    $region89: #{tpu_custom_call.1} parent=1 // pred_fallthru
      _
    // Predicated region
    $region90: #{tpu_custom_call.1} parent=1 // pred_check
      _
    $region91: #{tpu_custom_call.1} parent=1 // pred_check_branch
      %1492 = sbr.rel (0) target = $region93
    $region92: #{tpu_custom_call.1} parent=1 // pred_region
      %1494 = dma.done [#allocation20], 32
    $region93: #{tpu_custom_call.1} parent=1 // pred_fallthru
      _
    // Predicated region
    $region94: #{tpu_custom_call.1} parent=1 // pred_check
      _
    $region95: #{tpu_custom_call.1} parent=1 // pred_check_branch
      %1496 = sbr.rel (0) target = $region97
    $region96: #{tpu_custom_call.1} parent=1 // pred_region
      %1498 = dma.done [#allocation20], 32
    $region97: #{tpu_custom_call.1} parent=1 // pred_fallthru
      _
    %1499 = vsyncpa [#allocation5], 1
    %1500 = vsyncpa [#allocation8], 1
    %1501 = vsyncpa [#allocation11], 1
    %1502 = vsyncpa [#allocation14], 1
    %1503 = vsyncpa [#allocation17], 1
    %1504 = vsyncpa [#allocation6], 1
    %1505 = vsyncpa [#allocation20], 1

</llo_original>
